<compile_context>
chip_gen: v6e
topology: v6e:2x2x1
jax: 0.10.0
libtpu: 0.0.40
codegen_flags: <defaults>
</compile_context>

<pallas_src>
import functools

import jax
import jax.numpy as jnp
from jax.experimental import pallas as pl
from jax.experimental.pallas import tpu as pltpu


def _lstm_recurrence_kernel(x_ref, wih_ref, whh_ref, b_ref, h_out_ref, xp_scr,
                            *, seq_len, batch, hidden):
    """x_ref: (S*B, E) f32; wih_ref: (E, 4H) f32; whh_ref: (H, 4H) bf16;
    b_ref: (1, 4H) f32; h_out_ref: (B, H) f32; xp_scr: (S*B, 4H) f32 scratch."""
    H = hidden
    B = batch

    # One big MXU matmul for the input projection over all timesteps, with the
    # (b_ih + b_hh) bias folded in once (not per step). Off the serial path.
    xp_scr[...] = (
        jnp.dot(x_ref[...], wih_ref[...], preferred_element_type=jnp.float32)
        + b_ref[...]
    )

    def sig(z):
        # EUP-only sigmoid: sigmoid(z) == 0.5 * tanh(0.5 * z) + 0.5
        # (single tanh push instead of exp + VPU divide).
        return 0.5 * jnp.tanh(0.5 * z) + 0.5

    def step(t, carry):
        h, c = carry
        row = pl.multiple_of(t * B, B)  # B is a multiple of 8 -> aligned slice
        h_b = h.astype(jnp.bfloat16)    # bf16 LHS for the MXU

        def gate_pre(k):
            # Read the per-gate (H, H) weight slice from the ref inside the
            # dot (no 64-vreg hoist of the full W_hh), bf16 x bf16 -> f32.
            return (
                xp_scr[pl.ds(row, B), pl.ds(k * H, H)]
                + jnp.dot(h_b, whh_ref[:, pl.ds(k * H, H)],
                          preferred_element_type=jnp.float32)
            )

        # Per-gate dots in order i, f, g, o; activations consumed as soon as
        # each gate's result is available so EUP/VPU overlap the next MXU push.
        i_g = sig(gate_pre(0))
        f_g = sig(gate_pre(1))
        g_g = jnp.tanh(gate_pre(2))
        c = f_g * c + i_g * g_g          # cell update before the o-gate dot
        o_g = sig(gate_pre(3))
        h = o_g * jnp.tanh(c)
        return (h, c)

    h0 = jnp.zeros((B, H), jnp.float32)
    c0 = jnp.zeros((B, H), jnp.float32)
    h_last, _ = jax.lax.fori_loop(0, seq_len, step, (h0, c0),
                                  unroll=min(8, seq_len))

    h_out_ref[...] = h_last


def lstm_forward(text, emb_table, w_ih, w_hh, b_ih, b_hh, fc_w, fc_b):
    """text: (S, B) int32 token ids (seq-first, PyTorch nn.LSTM default).

    Returns prediction with PyTorch `.squeeze(0)` semantics.
    """
    S, B = text.shape
    E = emb_table.shape[1]
    H = w_hh.shape[1]           # w_hh: (4H, H)
    assert H % 128 == 0, "gate slicing assumes lane-aligned (multiple-of-128) H"

    # Pad batch to a multiple of 8 (f32 sublane); padded rows are zeros and
    # are sliced off before the final Linear.
    B_pad = max(8, ((B + 7) // 8) * 8)

    # XLA glue: embedding gather, padding, parameter transposes, bias fusion.
    embedded = emb_table[text]                      # (S, B, E) float32
    if B_pad != B:
        embedded = jnp.pad(embedded, ((0, 0), (0, B_pad - B), (0, 0)))
    x_flat = embedded.reshape(S * B_pad, E)         # (S*B_pad, E) f32

    wih_t = jnp.transpose(w_ih)                     # (E, 4H) f32
    whh_t = jnp.transpose(w_hh).astype(jnp.bfloat16)  # (H, 4H) bf16 (MXU operand)
    bias = (b_ih + b_hh).reshape(1, 4 * H)          # (1, 4H) f32

    kernel = functools.partial(
        _lstm_recurrence_kernel, seq_len=S, batch=B_pad, hidden=H)

    # Explicit VMEM budget: actual footprint x2 headroom, clamped to a range
    # that is valid on v5e/v6e (128 MiB) and v7x (64 MiB physical).
    vmem_needed = (x_flat.size * 4 + wih_t.size * 4 + whh_t.size * 2
                   + bias.size * 4 + B_pad * H * 4
                   + S * B_pad * 4 * H * 4)
    vmem_limit = int(min(64 << 20, max(8 << 20, 2 * vmem_needed)))

    h_last = pl.pallas_call(
        kernel,
        out_shape=jax.ShapeDtypeStruct((B_pad, H), jnp.float32),
        in_specs=[pl.BlockSpec(memory_space=pltpu.MemorySpace.VMEM)] * 4,
        out_specs=pl.BlockSpec(memory_space=pltpu.MemorySpace.VMEM),
        scratch_shapes=[pltpu.VMEM((S * B_pad, 4 * H), jnp.float32)],
        compiler_params=pltpu.CompilerParams(vmem_limit_bytes=vmem_limit),
    )(x_flat, wih_t, whh_t, bias)

    # Final Linear (out_dim = 1) on the lane-dense hidden state, done in XLA:
    # a (B, H) x (H, 1) matmul runs once, so keeping it outside avoids a
    # lane-width-1 masked-store kernel output.
    pred = h_last[:B] @ jnp.transpose(fc_w) + fc_b  # (B, out_dim)

    # PyTorch prediction.squeeze(0): only squeezes if dim 0 has size 1.
    if pred.shape[0] == 1:
        pred = pred[0]
    return pred


def lstm_reference(text, emb_table, w_ih, w_hh, b_ih, b_hh, fc_w, fc_b):
    """Pure-JAX reference matching torch semantics (f32 throughout)."""
    embedded = emb_table[text]                   # (S, B, E)
    S, B, _ = embedded.shape
    H = w_hh.shape[1]
    h = jnp.zeros((B, H), jnp.float32)
    c = jnp.zeros((B, H), jnp.float32)

    def step(carry, x_t):
        h, c = carry
        gates = x_t @ w_ih.T + h @ w_hh.T + b_ih + b_hh
        i = jax.nn.sigmoid(gates[:, 0 * H:1 * H])
        f = jax.nn.sigmoid(gates[:, 1 * H:2 * H])
        g = jnp.tanh(gates[:, 2 * H:3 * H])
        o = jax.nn.sigmoid(gates[:, 3 * H:4 * H])
        c = f * c + i * g
        h = o * jnp.tanh(c)
        return (h, c), None

    (h, c), _ = jax.lax.scan(step, (h, c), embedded)
    pred = h @ fc_w.T + fc_b
    if pred.shape[0] == 1:
        pred = pred[0]
    return pred


if __name__ == "__main__":
    VOCAB_SIZE = 256
    embedding_dim = 128
    hidden_dim = 128
    output_dim = 1
    seq_len = 8
    batch = 2

    key = jax.random.PRNGKey(0)
    keys = jax.random.split(key, 8)

    # Deterministic synthetic parameters (shapes follow nn.Embedding / nn.LSTM / nn.Linear).
    emb_table = jax.random.normal(keys[0], (VOCAB_SIZE, embedding_dim), jnp.float32)
    k = 1.0 / jnp.sqrt(jnp.float32(hidden_dim))
    w_ih = jax.random.uniform(keys[1], (4 * hidden_dim, embedding_dim), jnp.float32, -k, k)
    w_hh = jax.random.uniform(keys[2], (4 * hidden_dim, hidden_dim), jnp.float32, -k, k)
    b_ih = jax.random.uniform(keys[3], (4 * hidden_dim,), jnp.float32, -k, k)
    b_hh = jax.random.uniform(keys[4], (4 * hidden_dim,), jnp.float32, -k, k)
    kf = 1.0 / jnp.sqrt(jnp.float32(hidden_dim))
    fc_w = jax.random.uniform(keys[5], (output_dim, hidden_dim), jnp.float32, -kf, kf)
    fc_b = jax.random.uniform(keys[6], (output_dim,), jnp.float32, -kf, kf)

    text = jax.random.randint(keys[7], (seq_len, batch), 0, VOCAB_SIZE, jnp.int32)

    pred = lstm_forward(text, emb_table, w_ih, w_hh, b_ih, b_hh, fc_w, fc_b)
    pred = jax.block_until_ready(pred)

    ref = lstm_reference(text, emb_table, w_ih, w_hh, b_ih, b_hh, fc_w, fc_b)
    assert pred.shape == ref.shape, (pred.shape, ref.shape)
    # Tolerance loosened vs the all-f32 version because the recurrent matmul
    # now uses bf16 MXU operands (f32 accumulation, f32 h/c state).
    assert jnp.allclose(pred, ref, atol=2e-2, rtol=2e-2), (pred, ref)

    print("KERNEL_OK")
</pallas_src>

<mosaic_0001>
module attributes {stable_mosaic.version = 11 : i64} {
  func.func @_lstm_recurrence_kernel(%arg0: memref<64x128xf32, #tpu.memory_space<vmem>>, %arg1: memref<128x512xf32, #tpu.memory_space<vmem>>, %arg2: memref<128x512xbf16, #tpu.memory_space<vmem>>, %arg3: memref<1x512xf32, #tpu.memory_space<vmem>>, %arg4: memref<8x128xf32, #tpu.memory_space<vmem>>, %arg5: memref<64x512xf32, #tpu.memory_space<vmem>>) attributes {dimension_semantics = [], scalar_prefetch = 0 : i64, scratch_operands = 1 : i64, tpu.core_type = #tpu.core_type<tc>} {
    %c0 = arith.constant 0 : index
    %c0_0 = arith.constant 0 : index
    %0 = vector.load %arg0[%c0, %c0_0] : memref<64x128xf32, #tpu.memory_space<vmem>>, vector<64x128xf32>
    %c0_1 = arith.constant 0 : index
    %c0_2 = arith.constant 0 : index
    %1 = vector.load %arg1[%c0_1, %c0_2] : memref<128x512xf32, #tpu.memory_space<vmem>>, vector<128x512xf32>
    %cst = arith.constant dense<0.000000e+00> : vector<64x512xf32>
    %2 = tpu.matmul %0, %1, %cst {dimension_numbers = #tpu.dot_dimension_numbers<[1], [0], [0], [1], [0, 0, 1, 1], [], []>} : vector<64x128xf32>, vector<128x512xf32>, vector<64x512xf32> -> vector<64x512xf32>
    %c0_3 = arith.constant 0 : index
    %c0_4 = arith.constant 0 : index
    %3 = vector.load %arg3[%c0_3, %c0_4] : memref<1x512xf32, #tpu.memory_space<vmem>>, vector<1x512xf32>
    %4 = vector.broadcast %3 : vector<1x512xf32> to vector<64x512xf32>
    %5 = arith.addf %2, %4 : vector<64x512xf32>
    %c0_5 = arith.constant 0 : index
    %c0_6 = arith.constant 0 : index
    %6 = vector.load %arg5[%c0_5, %c0_6] : memref<64x512xf32, #tpu.memory_space<vmem>>, vector<64x512xf32>
    tpu.vector_store %arg5[%c0_5, %c0_6], %5 {strides = array<i32>} : memref<64x512xf32, #tpu.memory_space<vmem>>, vector<64x512xf32>,
    %cst_7 = arith.constant 0.000000e+00 : f32
    %7 = vector.broadcast %cst_7 : f32 to vector<8x128xf32>
    %cst_8 = arith.constant 0.000000e+00 : f32
    %8 = vector.broadcast %cst_8 : f32 to vector<8x128xf32>
    %c0_i32 = arith.constant 0 : i32
    %c8_i32 = arith.constant 8 : i32
    %9 = arith.muli %c0_i32, %c8_i32 : i32
    %10 = tpu.assume_multiple %9, 8 : i32
    %11 = arith.truncf %7 : vector<8x128xf32> to vector<8x128xbf16>
    %12 = arith.index_cast %10 : i32 to index
    %c0_9 = arith.constant 0 : index
    %13 = vector.load %arg5[%12, %c0_9] : memref<64x512xf32, #tpu.memory_space<vmem>>, vector<8x128xf32>
    %c0_10 = arith.constant 0 : index
    %c0_11 = arith.constant 0 : index
    %14 = vector.load %arg2[%c0_10, %c0_11] : memref<128x512xbf16, #tpu.memory_space<vmem>>, vector<128x128xbf16>
    %cst_12 = arith.constant dense<0.000000e+00> : vector<8x128xf32>
    %15 = tpu.matmul %11, %14, %cst_12 {dimension_numbers = #tpu.dot_dimension_numbers<[1], [0], [0], [1], [0, 0, 1, 1], [], []>} : vector<8x128xbf16>, vector<128x128xbf16>, vector<8x128xf32> -> vector<8x128xf32>
    %16 = arith.addf %13, %15 : vector<8x128xf32>
    %cst_13 = arith.constant 5.000000e-01 : f32
    %17 = vector.broadcast %cst_13 : f32 to vector<8x128xf32>
    %18 = arith.mulf %17, %16 : vector<8x128xf32>
    %19 = math.tanh %18 : vector<8x128xf32>
    %cst_14 = arith.constant 5.000000e-01 : f32
    %20 = vector.broadcast %cst_14 : f32 to vector<8x128xf32>
    %21 = arith.mulf %20, %19 : vector<8x128xf32>
    %cst_15 = arith.constant 5.000000e-01 : f32
    %22 = vector.broadcast %cst_15 : f32 to vector<8x128xf32>
    %23 = arith.addf %21, %22 : vector<8x128xf32>
    %24 = arith.index_cast %10 : i32 to index
    %c128 = arith.constant 128 : index
    %25 = vector.load %arg5[%24, %c128] : memref<64x512xf32, #tpu.memory_space<vmem>>, vector<8x128xf32>
    %c0_16 = arith.constant 0 : index
    %c128_17 = arith.constant 128 : index
    %26 = vector.load %arg2[%c0_16, %c128_17] : memref<128x512xbf16, #tpu.memory_space<vmem>>, vector<128x128xbf16>
    %cst_18 = arith.constant dense<0.000000e+00> : vector<8x128xf32>
    %27 = tpu.matmul %11, %26, %cst_18 {dimension_numbers = #tpu.dot_dimension_numbers<[1], [0], [0], [1], [0, 0, 1, 1], [], []>} : vector<8x128xbf16>, vector<128x128xbf16>, vector<8x128xf32> -> vector<8x128xf32>
    %28 = arith.addf %25, %27 : vector<8x128xf32>
    %cst_19 = arith.constant 5.000000e-01 : f32
    %29 = vector.broadcast %cst_19 : f32 to vector<8x128xf32>
    %30 = arith.mulf %29, %28 : vector<8x128xf32>
    %31 = math.tanh %30 : vector<8x128xf32>
    %cst_20 = arith.constant 5.000000e-01 : f32
    %32 = vector.broadcast %cst_20 : f32 to vector<8x128xf32>
    %33 = arith.mulf %32, %31 : vector<8x128xf32>
    %cst_21 = arith.constant 5.000000e-01 : f32
    %34 = vector.broadcast %cst_21 : f32 to vector<8x128xf32>
    %35 = arith.addf %33, %34 : vector<8x128xf32>
    %36 = arith.index_cast %10 : i32 to index
    %c256 = arith.constant 256 : index
    %37 = vector.load %arg5[%36, %c256] : memref<64x512xf32, #tpu.memory_space<vmem>>, vector<8x128xf32>
    %c0_22 = arith.constant 0 : index
    %c256_23 = arith.constant 256 : index
    %38 = vector.load %arg2[%c0_22, %c256_23] : memref<128x512xbf16, #tpu.memory_space<vmem>>, vector<128x128xbf16>
    %cst_24 = arith.constant dense<0.000000e+00> : vector<8x128xf32>
    %39 = tpu.matmul %11, %38, %cst_24 {dimension_numbers = #tpu.dot_dimension_numbers<[1], [0], [0], [1], [0, 0, 1, 1], [], []>} : vector<8x128xbf16>, vector<128x128xbf16>, vector<8x128xf32> -> vector<8x128xf32>
    %40 = arith.addf %37, %39 : vector<8x128xf32>
    %41 = math.tanh %40 : vector<8x128xf32>
    %42 = arith.mulf %35, %8 : vector<8x128xf32>
    %43 = arith.mulf %23, %41 : vector<8x128xf32>
    %44 = arith.addf %42, %43 : vector<8x128xf32>
    %45 = arith.index_cast %10 : i32 to index
    %c384 = arith.constant 384 : index
    %46 = vector.load %arg5[%45, %c384] : memref<64x512xf32, #tpu.memory_space<vmem>>, vector<8x128xf32>
    %c0_25 = arith.constant 0 : index
    %c384_26 = arith.constant 384 : index
    %47 = vector.load %arg2[%c0_25, %c384_26] : memref<128x512xbf16, #tpu.memory_space<vmem>>, vector<128x128xbf16>
    %cst_27 = arith.constant dense<0.000000e+00> : vector<8x128xf32>
    %48 = tpu.matmul %11, %47, %cst_27 {dimension_numbers = #tpu.dot_dimension_numbers<[1], [0], [0], [1], [0, 0, 1, 1], [], []>} : vector<8x128xbf16>, vector<128x128xbf16>, vector<8x128xf32> -> vector<8x128xf32>
    %49 = arith.addf %46, %48 : vector<8x128xf32>
    %cst_28 = arith.constant 5.000000e-01 : f32
    %50 = vector.broadcast %cst_28 : f32 to vector<8x128xf32>
    %51 = arith.mulf %50, %49 : vector<8x128xf32>
    %52 = math.tanh %51 : vector<8x128xf32>
    %cst_29 = arith.constant 5.000000e-01 : f32
    %53 = vector.broadcast %cst_29 : f32 to vector<8x128xf32>
    %54 = arith.mulf %53, %52 : vector<8x128xf32>
    %cst_30 = arith.constant 5.000000e-01 : f32
    %55 = vector.broadcast %cst_30 : f32 to vector<8x128xf32>
    %56 = arith.addf %54, %55 : vector<8x128xf32>
    %57 = math.tanh %44 : vector<8x128xf32>
    %58 = arith.mulf %56, %57 : vector<8x128xf32>
    %c1_i32 = arith.constant 1 : i32
    %c8_i32_31 = arith.constant 8 : i32
    %59 = arith.muli %c1_i32, %c8_i32_31 : i32
    %60 = tpu.assume_multiple %59, 8 : i32
    %61 = arith.truncf %58 : vector<8x128xf32> to vector<8x128xbf16>
    %62 = arith.index_cast %60 : i32 to index
    %c0_32 = arith.constant 0 : index
    %63 = vector.load %arg5[%62, %c0_32] : memref<64x512xf32, #tpu.memory_space<vmem>>, vector<8x128xf32>
    %c0_33 = arith.constant 0 : index
    %c0_34 = arith.constant 0 : index
    %64 = vector.load %arg2[%c0_33, %c0_34] : memref<128x512xbf16, #tpu.memory_space<vmem>>, vector<128x128xbf16>
    %cst_35 = arith.constant dense<0.000000e+00> : vector<8x128xf32>
    %65 = tpu.matmul %61, %64, %cst_35 {dimension_numbers = #tpu.dot_dimension_numbers<[1], [0], [0], [1], [0, 0, 1, 1], [], []>} : vector<8x128xbf16>, vector<128x128xbf16>, vector<8x128xf32> -> vector<8x128xf32>
    %66 = arith.addf %63, %65 : vector<8x128xf32>
    %cst_36 = arith.constant 5.000000e-01 : f32
    %67 = vector.broadcast %cst_36 : f32 to vector<8x128xf32>
    %68 = arith.mulf %67, %66 : vector<8x128xf32>
    %69 = math.tanh %68 : vector<8x128xf32>
    %cst_37 = arith.constant 5.000000e-01 : f32
    %70 = vector.broadcast %cst_37 : f32 to vector<8x128xf32>
    %71 = arith.mulf %70, %69 : vector<8x128xf32>
    %cst_38 = arith.constant 5.000000e-01 : f32
    %72 = vector.broadcast %cst_38 : f32 to vector<8x128xf32>
    %73 = arith.addf %71, %72 : vector<8x128xf32>
    %74 = arith.index_cast %60 : i32 to index
    %c128_39 = arith.constant 128 : index
    %75 = vector.load %arg5[%74, %c128_39] : memref<64x512xf32, #tpu.memory_space<vmem>>, vector<8x128xf32>
    %c0_40 = arith.constant 0 : index
    %c128_41 = arith.constant 128 : index
    %76 = vector.load %arg2[%c0_40, %c128_41] : memref<128x512xbf16, #tpu.memory_space<vmem>>, vector<128x128xbf16>
    %cst_42 = arith.constant dense<0.000000e+00> : vector<8x128xf32>
    %77 = tpu.matmul %61, %76, %cst_42 {dimension_numbers = #tpu.dot_dimension_numbers<[1], [0], [0], [1], [0, 0, 1, 1], [], []>} : vector<8x128xbf16>, vector<128x128xbf16>, vector<8x128xf32> -> vector<8x128xf32>
    %78 = arith.addf %75, %77 : vector<8x128xf32>
    %cst_43 = arith.constant 5.000000e-01 : f32
    %79 = vector.broadcast %cst_43 : f32 to vector<8x128xf32>
    %80 = arith.mulf %79, %78 : vector<8x128xf32>
    %81 = math.tanh %80 : vector<8x128xf32>
    %cst_44 = arith.constant 5.000000e-01 : f32
    %82 = vector.broadcast %cst_44 : f32 to vector<8x128xf32>
    %83 = arith.mulf %82, %81 : vector<8x128xf32>
    %cst_45 = arith.constant 5.000000e-01 : f32
    %84 = vector.broadcast %cst_45 : f32 to vector<8x128xf32>
    %85 = arith.addf %83, %84 : vector<8x128xf32>
    %86 = arith.index_cast %60 : i32 to index
    %c256_46 = arith.constant 256 : index
    %87 = vector.load %arg5[%86, %c256_46] : memref<64x512xf32, #tpu.memory_space<vmem>>, vector<8x128xf32>
    %c0_47 = arith.constant 0 : index
    %c256_48 = arith.constant 256 : index
    %88 = vector.load %arg2[%c0_47, %c256_48] : memref<128x512xbf16, #tpu.memory_space<vmem>>, vector<128x128xbf16>
    %cst_49 = arith.constant dense<0.000000e+00> : vector<8x128xf32>
    %89 = tpu.matmul %61, %88, %cst_49 {dimension_numbers = #tpu.dot_dimension_numbers<[1], [0], [0], [1], [0, 0, 1, 1], [], []>} : vector<8x128xbf16>, vector<128x128xbf16>, vector<8x128xf32> -> vector<8x128xf32>
    %90 = arith.addf %87, %89 : vector<8x128xf32>
    %91 = math.tanh %90 : vector<8x128xf32>
    %92 = arith.mulf %85, %44 : vector<8x128xf32>
    %93 = arith.mulf %73, %91 : vector<8x128xf32>
    %94 = arith.addf %92, %93 : vector<8x128xf32>
    %95 = arith.index_cast %60 : i32 to index
    %c384_50 = arith.constant 384 : index
    %96 = vector.load %arg5[%95, %c384_50] : memref<64x512xf32, #tpu.memory_space<vmem>>, vector<8x128xf32>
    %c0_51 = arith.constant 0 : index
    %c384_52 = arith.constant 384 : index
    %97 = vector.load %arg2[%c0_51, %c384_52] : memref<128x512xbf16, #tpu.memory_space<vmem>>, vector<128x128xbf16>
    %cst_53 = arith.constant dense<0.000000e+00> : vector<8x128xf32>
    %98 = tpu.matmul %61, %97, %cst_53 {dimension_numbers = #tpu.dot_dimension_numbers<[1], [0], [0], [1], [0, 0, 1, 1], [], []>} : vector<8x128xbf16>, vector<128x128xbf16>, vector<8x128xf32> -> vector<8x128xf32>
    %99 = arith.addf %96, %98 : vector<8x128xf32>
    %cst_54 = arith.constant 5.000000e-01 : f32
    %100 = vector.broadcast %cst_54 : f32 to vector<8x128xf32>
    %101 = arith.mulf %100, %99 : vector<8x128xf32>
    %102 = math.tanh %101 : vector<8x128xf32>
    %cst_55 = arith.constant 5.000000e-01 : f32
    %103 = vector.broadcast %cst_55 : f32 to vector<8x128xf32>
    %104 = arith.mulf %103, %102 : vector<8x128xf32>
    %cst_56 = arith.constant 5.000000e-01 : f32
    %105 = vector.broadcast %cst_56 : f32 to vector<8x128xf32>
    %106 = arith.addf %104, %105 : vector<8x128xf32>
    %107 = math.tanh %94 : vector<8x128xf32>
    %108 = arith.mulf %106, %107 : vector<8x128xf32>
    %c2_i32 = arith.constant 2 : i32
    %c8_i32_57 = arith.constant 8 : i32
    %109 = arith.muli %c2_i32, %c8_i32_57 : i32
    %110 = tpu.assume_multiple %109, 8 : i32
    %111 = arith.truncf %108 : vector<8x128xf32> to vector<8x128xbf16>
    %112 = arith.index_cast %110 : i32 to index
    %c0_58 = arith.constant 0 : index
    %113 = vector.load %arg5[%112, %c0_58] : memref<64x512xf32, #tpu.memory_space<vmem>>, vector<8x128xf32>
    %c0_59 = arith.constant 0 : index
    %c0_60 = arith.constant 0 : index
    %114 = vector.load %arg2[%c0_59, %c0_60] : memref<128x512xbf16, #tpu.memory_space<vmem>>, vector<128x128xbf16>
    %cst_61 = arith.constant dense<0.000000e+00> : vector<8x128xf32>
    %115 = tpu.matmul %111, %114, %cst_61 {dimension_numbers = #tpu.dot_dimension_numbers<[1], [0], [0], [1], [0, 0, 1, 1], [], []>} : vector<8x128xbf16>, vector<128x128xbf16>, vector<8x128xf32> -> vector<8x128xf32>
    %116 = arith.addf %113, %115 : vector<8x128xf32>
    %cst_62 = arith.constant 5.000000e-01 : f32
    %117 = vector.broadcast %cst_62 : f32 to vector<8x128xf32>
    %118 = arith.mulf %117, %116 : vector<8x128xf32>
    %119 = math.tanh %118 : vector<8x128xf32>
    %cst_63 = arith.constant 5.000000e-01 : f32
    %120 = vector.broadcast %cst_63 : f32 to vector<8x128xf32>
    %121 = arith.mulf %120, %119 : vector<8x128xf32>
    %cst_64 = arith.constant 5.000000e-01 : f32
    %122 = vector.broadcast %cst_64 : f32 to vector<8x128xf32>
    %123 = arith.addf %121, %122 : vector<8x128xf32>
    %124 = arith.index_cast %110 : i32 to index
    %c128_65 = arith.constant 128 : index
    %125 = vector.load %arg5[%124, %c128_65] : memref<64x512xf32, #tpu.memory_space<vmem>>, vector<8x128xf32>
    %c0_66 = arith.constant 0 : index
    %c128_67 = arith.constant 128 : index
    %126 = vector.load %arg2[%c0_66, %c128_67] : memref<128x512xbf16, #tpu.memory_space<vmem>>, vector<128x128xbf16>
    %cst_68 = arith.constant dense<0.000000e+00> : vector<8x128xf32>
    %127 = tpu.matmul %111, %126, %cst_68 {dimension_numbers = #tpu.dot_dimension_numbers<[1], [0], [0], [1], [0, 0, 1, 1], [], []>} : vector<8x128xbf16>, vector<128x128xbf16>, vector<8x128xf32> -> vector<8x128xf32>
    %128 = arith.addf %125, %127 : vector<8x128xf32>
    %cst_69 = arith.constant 5.000000e-01 : f32
    %129 = vector.broadcast %cst_69 : f32 to vector<8x128xf32>
    %130 = arith.mulf %129, %128 : vector<8x128xf32>
    %131 = math.tanh %130 : vector<8x128xf32>
    %cst_70 = arith.constant 5.000000e-01 : f32
    %132 = vector.broadcast %cst_70 : f32 to vector<8x128xf32>
    %133 = arith.mulf %132, %131 : vector<8x128xf32>
    %cst_71 = arith.constant 5.000000e-01 : f32
    %134 = vector.broadcast %cst_71 : f32 to vector<8x128xf32>
    %135 = arith.addf %133, %134 : vector<8x128xf32>
    %136 = arith.index_cast %110 : i32 to index
    %c256_72 = arith.constant 256 : index
    %137 = vector.load %arg5[%136, %c256_72] : memref<64x512xf32, #tpu.memory_space<vmem>>, vector<8x128xf32>
    %c0_73 = arith.constant 0 : index
    %c256_74 = arith.constant 256 : index
    %138 = vector.load %arg2[%c0_73, %c256_74] : memref<128x512xbf16, #tpu.memory_space<vmem>>, vector<128x128xbf16>
    %cst_75 = arith.constant dense<0.000000e+00> : vector<8x128xf32>
    %139 = tpu.matmul %111, %138, %cst_75 {dimension_numbers = #tpu.dot_dimension_numbers<[1], [0], [0], [1], [0, 0, 1, 1], [], []>} : vector<8x128xbf16>, vector<128x128xbf16>, vector<8x128xf32> -> vector<8x128xf32>
    %140 = arith.addf %137, %139 : vector<8x128xf32>
    %141 = math.tanh %140 : vector<8x128xf32>
    %142 = arith.mulf %135, %94 : vector<8x128xf32>
    %143 = arith.mulf %123, %141 : vector<8x128xf32>
    %144 = arith.addf %142, %143 : vector<8x128xf32>
    %145 = arith.index_cast %110 : i32 to index
    %c384_76 = arith.constant 384 : index
    %146 = vector.load %arg5[%145, %c384_76] : memref<64x512xf32, #tpu.memory_space<vmem>>, vector<8x128xf32>
    %c0_77 = arith.constant 0 : index
    %c384_78 = arith.constant 384 : index
    %147 = vector.load %arg2[%c0_77, %c384_78] : memref<128x512xbf16, #tpu.memory_space<vmem>>, vector<128x128xbf16>
    %cst_79 = arith.constant dense<0.000000e+00> : vector<8x128xf32>
    %148 = tpu.matmul %111, %147, %cst_79 {dimension_numbers = #tpu.dot_dimension_numbers<[1], [0], [0], [1], [0, 0, 1, 1], [], []>} : vector<8x128xbf16>, vector<128x128xbf16>, vector<8x128xf32> -> vector<8x128xf32>
    %149 = arith.addf %146, %148 : vector<8x128xf32>
    %cst_80 = arith.constant 5.000000e-01 : f32
    %150 = vector.broadcast %cst_80 : f32 to vector<8x128xf32>
    %151 = arith.mulf %150, %149 : vector<8x128xf32>
    %152 = math.tanh %151 : vector<8x128xf32>
    %cst_81 = arith.constant 5.000000e-01 : f32
    %153 = vector.broadcast %cst_81 : f32 to vector<8x128xf32>
    %154 = arith.mulf %153, %152 : vector<8x128xf32>
    %cst_82 = arith.constant 5.000000e-01 : f32
    %155 = vector.broadcast %cst_82 : f32 to vector<8x128xf32>
    %156 = arith.addf %154, %155 : vector<8x128xf32>
    %157 = math.tanh %144 : vector<8x128xf32>
    %158 = arith.mulf %156, %157 : vector<8x128xf32>
    %c3_i32 = arith.constant 3 : i32
    %c8_i32_83 = arith.constant 8 : i32
    %159 = arith.muli %c3_i32, %c8_i32_83 : i32
    %160 = tpu.assume_multiple %159, 8 : i32
    %161 = arith.truncf %158 : vector<8x128xf32> to vector<8x128xbf16>
    %162 = arith.index_cast %160 : i32 to index
    %c0_84 = arith.constant 0 : index
    %163 = vector.load %arg5[%162, %c0_84] : memref<64x512xf32, #tpu.memory_space<vmem>>, vector<8x128xf32>
    %c0_85 = arith.constant 0 : index
    %c0_86 = arith.constant 0 : index
    %164 = vector.load %arg2[%c0_85, %c0_86] : memref<128x512xbf16, #tpu.memory_space<vmem>>, vector<128x128xbf16>
    %cst_87 = arith.constant dense<0.000000e+00> : vector<8x128xf32>
    %165 = tpu.matmul %161, %164, %cst_87 {dimension_numbers = #tpu.dot_dimension_numbers<[1], [0], [0], [1], [0, 0, 1, 1], [], []>} : vector<8x128xbf16>, vector<128x128xbf16>, vector<8x128xf32> -> vector<8x128xf32>
    %166 = arith.addf %163, %165 : vector<8x128xf32>
    %cst_88 = arith.constant 5.000000e-01 : f32
    %167 = vector.broadcast %cst_88 : f32 to vector<8x128xf32>
    %168 = arith.mulf %167, %166 : vector<8x128xf32>
    %169 = math.tanh %168 : vector<8x128xf32>
    %cst_89 = arith.constant 5.000000e-01 : f32
    %170 = vector.broadcast %cst_89 : f32 to vector<8x128xf32>
    %171 = arith.mulf %170, %169 : vector<8x128xf32>
    %cst_90 = arith.constant 5.000000e-01 : f32
    %172 = vector.broadcast %cst_90 : f32 to vector<8x128xf32>
    %173 = arith.addf %171, %172 : vector<8x128xf32>
    %174 = arith.index_cast %160 : i32 to index
    %c128_91 = arith.constant 128 : index
    %175 = vector.load %arg5[%174, %c128_91] : memref<64x512xf32, #tpu.memory_space<vmem>>, vector<8x128xf32>
    %c0_92 = arith.constant 0 : index
    %c128_93 = arith.constant 128 : index
    %176 = vector.load %arg2[%c0_92, %c128_93] : memref<128x512xbf16, #tpu.memory_space<vmem>>, vector<128x128xbf16>
    %cst_94 = arith.constant dense<0.000000e+00> : vector<8x128xf32>
    %177 = tpu.matmul %161, %176, %cst_94 {dimension_numbers = #tpu.dot_dimension_numbers<[1], [0], [0], [1], [0, 0, 1, 1], [], []>} : vector<8x128xbf16>, vector<128x128xbf16>, vector<8x128xf32> -> vector<8x128xf32>
    %178 = arith.addf %175, %177 : vector<8x128xf32>
    %cst_95 = arith.constant 5.000000e-01 : f32
    %179 = vector.broadcast %cst_95 : f32 to vector<8x128xf32>
    %180 = arith.mulf %179, %178 : vector<8x128xf32>
    %181 = math.tanh %180 : vector<8x128xf32>
    %cst_96 = arith.constant 5.000000e-01 : f32
    %182 = vector.broadcast %cst_96 : f32 to vector<8x128xf32>
    %183 = arith.mulf %182, %181 : vector<8x128xf32>
    %cst_97 = arith.constant 5.000000e-01 : f32
    %184 = vector.broadcast %cst_97 : f32 to vector<8x128xf32>
    %185 = arith.addf %183, %184 : vector<8x128xf32>
    %186 = arith.index_cast %160 : i32 to index
    %c256_98 = arith.constant 256 : index
    %187 = vector.load %arg5[%186, %c256_98] : memref<64x512xf32, #tpu.memory_space<vmem>>, vector<8x128xf32>
    %c0_99 = arith.constant 0 : index
    %c256_100 = arith.constant 256 : index
    %188 = vector.load %arg2[%c0_99, %c256_100] : memref<128x512xbf16, #tpu.memory_space<vmem>>, vector<128x128xbf16>
    %cst_101 = arith.constant dense<0.000000e+00> : vector<8x128xf32>
    %189 = tpu.matmul %161, %188, %cst_101 {dimension_numbers = #tpu.dot_dimension_numbers<[1], [0], [0], [1], [0, 0, 1, 1], [], []>} : vector<8x128xbf16>, vector<128x128xbf16>, vector<8x128xf32> -> vector<8x128xf32>
    %190 = arith.addf %187, %189 : vector<8x128xf32>
    %191 = math.tanh %190 : vector<8x128xf32>
    %192 = arith.mulf %185, %144 : vector<8x128xf32>
    %193 = arith.mulf %173, %191 : vector<8x128xf32>
    %194 = arith.addf %192, %193 : vector<8x128xf32>
    %195 = arith.index_cast %160 : i32 to index
    %c384_102 = arith.constant 384 : index
    %196 = vector.load %arg5[%195, %c384_102] : memref<64x512xf32, #tpu.memory_space<vmem>>, vector<8x128xf32>
    %c0_103 = arith.constant 0 : index
    %c384_104 = arith.constant 384 : index
    %197 = vector.load %arg2[%c0_103, %c384_104] : memref<128x512xbf16, #tpu.memory_space<vmem>>, vector<128x128xbf16>
    %cst_105 = arith.constant dense<0.000000e+00> : vector<8x128xf32>
    %198 = tpu.matmul %161, %197, %cst_105 {dimension_numbers = #tpu.dot_dimension_numbers<[1], [0], [0], [1], [0, 0, 1, 1], [], []>} : vector<8x128xbf16>, vector<128x128xbf16>, vector<8x128xf32> -> vector<8x128xf32>
    %199 = arith.addf %196, %198 : vector<8x128xf32>
    %cst_106 = arith.constant 5.000000e-01 : f32
    %200 = vector.broadcast %cst_106 : f32 to vector<8x128xf32>
    %201 = arith.mulf %200, %199 : vector<8x128xf32>
    %202 = math.tanh %201 : vector<8x128xf32>
    %cst_107 = arith.constant 5.000000e-01 : f32
    %203 = vector.broadcast %cst_107 : f32 to vector<8x128xf32>
    %204 = arith.mulf %203, %202 : vector<8x128xf32>
    %cst_108 = arith.constant 5.000000e-01 : f32
    %205 = vector.broadcast %cst_108 : f32 to vector<8x128xf32>
    %206 = arith.addf %204, %205 : vector<8x128xf32>
    %207 = math.tanh %194 : vector<8x128xf32>
    %208 = arith.mulf %206, %207 : vector<8x128xf32>
    %c4_i32 = arith.constant 4 : i32
    %c8_i32_109 = arith.constant 8 : i32
    %209 = arith.muli %c4_i32, %c8_i32_109 : i32
    %210 = tpu.assume_multiple %209, 8 : i32
    %211 = arith.truncf %208 : vector<8x128xf32> to vector<8x128xbf16>
    %212 = arith.index_cast %210 : i32 to index
    %c0_110 = arith.constant 0 : index
    %213 = vector.load %arg5[%212, %c0_110] : memref<64x512xf32, #tpu.memory_space<vmem>>, vector<8x128xf32>
    %c0_111 = arith.constant 0 : index
    %c0_112 = arith.constant 0 : index
    %214 = vector.load %arg2[%c0_111, %c0_112] : memref<128x512xbf16, #tpu.memory_space<vmem>>, vector<128x128xbf16>
    %cst_113 = arith.constant dense<0.000000e+00> : vector<8x128xf32>
    %215 = tpu.matmul %211, %214, %cst_113 {dimension_numbers = #tpu.dot_dimension_numbers<[1], [0], [0], [1], [0, 0, 1, 1], [], []>} : vector<8x128xbf16>, vector<128x128xbf16>, vector<8x128xf32> -> vector<8x128xf32>
    %216 = arith.addf %213, %215 : vector<8x128xf32>
    %cst_114 = arith.constant 5.000000e-01 : f32
    %217 = vector.broadcast %cst_114 : f32 to vector<8x128xf32>
    %218 = arith.mulf %217, %216 : vector<8x128xf32>
    %219 = math.tanh %218 : vector<8x128xf32>
    %cst_115 = arith.constant 5.000000e-01 : f32
    %220 = vector.broadcast %cst_115 : f32 to vector<8x128xf32>
    %221 = arith.mulf %220, %219 : vector<8x128xf32>
    %cst_116 = arith.constant 5.000000e-01 : f32
    %222 = vector.broadcast %cst_116 : f32 to vector<8x128xf32>
    %223 = arith.addf %221, %222 : vector<8x128xf32>
    %224 = arith.index_cast %210 : i32 to index
    %c128_117 = arith.constant 128 : index
    %225 = vector.load %arg5[%224, %c128_117] : memref<64x512xf32, #tpu.memory_space<vmem>>, vector<8x128xf32>
    %c0_118 = arith.constant 0 : index
    %c128_119 = arith.constant 128 : index
    %226 = vector.load %arg2[%c0_118, %c128_119] : memref<128x512xbf16, #tpu.memory_space<vmem>>, vector<128x128xbf16>
    %cst_120 = arith.constant dense<0.000000e+00> : vector<8x128xf32>
    %227 = tpu.matmul %211, %226, %cst_120 {dimension_numbers = #tpu.dot_dimension_numbers<[1], [0], [0], [1], [0, 0, 1, 1], [], []>} : vector<8x128xbf16>, vector<128x128xbf16>, vector<8x128xf32> -> vector<8x128xf32>
    %228 = arith.addf %225, %227 : vector<8x128xf32>
    %cst_121 = arith.constant 5.000000e-01 : f32
    %229 = vector.broadcast %cst_121 : f32 to vector<8x128xf32>
    %230 = arith.mulf %229, %228 : vector<8x128xf32>
    %231 = math.tanh %230 : vector<8x128xf32>
    %cst_122 = arith.constant 5.000000e-01 : f32
    %232 = vector.broadcast %cst_122 : f32 to vector<8x128xf32>
    %233 = arith.mulf %232, %231 : vector<8x128xf32>
    %cst_123 = arith.constant 5.000000e-01 : f32
    %234 = vector.broadcast %cst_123 : f32 to vector<8x128xf32>
    %235 = arith.addf %233, %234 : vector<8x128xf32>
    %236 = arith.index_cast %210 : i32 to index
    %c256_124 = arith.constant 256 : index
    %237 = vector.load %arg5[%236, %c256_124] : memref<64x512xf32, #tpu.memory_space<vmem>>, vector<8x128xf32>
    %c0_125 = arith.constant 0 : index
    %c256_126 = arith.constant 256 : index
    %238 = vector.load %arg2[%c0_125, %c256_126] : memref<128x512xbf16, #tpu.memory_space<vmem>>, vector<128x128xbf16>
    %cst_127 = arith.constant dense<0.000000e+00> : vector<8x128xf32>
    %239 = tpu.matmul %211, %238, %cst_127 {dimension_numbers = #tpu.dot_dimension_numbers<[1], [0], [0], [1], [0, 0, 1, 1], [], []>} : vector<8x128xbf16>, vector<128x128xbf16>, vector<8x128xf32> -> vector<8x128xf32>
    %240 = arith.addf %237, %239 : vector<8x128xf32>
    %241 = math.tanh %240 : vector<8x128xf32>
    %242 = arith.mulf %235, %194 : vector<8x128xf32>
    %243 = arith.mulf %223, %241 : vector<8x128xf32>
    %244 = arith.addf %242, %243 : vector<8x128xf32>
    %245 = arith.index_cast %210 : i32 to index
    %c384_128 = arith.constant 384 : index
    %246 = vector.load %arg5[%245, %c384_128] : memref<64x512xf32, #tpu.memory_space<vmem>>, vector<8x128xf32>
    %c0_129 = arith.constant 0 : index
    %c384_130 = arith.constant 384 : index
    %247 = vector.load %arg2[%c0_129, %c384_130] : memref<128x512xbf16, #tpu.memory_space<vmem>>, vector<128x128xbf16>
    %cst_131 = arith.constant dense<0.000000e+00> : vector<8x128xf32>
    %248 = tpu.matmul %211, %247, %cst_131 {dimension_numbers = #tpu.dot_dimension_numbers<[1], [0], [0], [1], [0, 0, 1, 1], [], []>} : vector<8x128xbf16>, vector<128x128xbf16>, vector<8x128xf32> -> vector<8x128xf32>
    %249 = arith.addf %246, %248 : vector<8x128xf32>
    %cst_132 = arith.constant 5.000000e-01 : f32
    %250 = vector.broadcast %cst_132 : f32 to vector<8x128xf32>
    %251 = arith.mulf %250, %249 : vector<8x128xf32>
    %252 = math.tanh %251 : vector<8x128xf32>
    %cst_133 = arith.constant 5.000000e-01 : f32
    %253 = vector.broadcast %cst_133 : f32 to vector<8x128xf32>
    %254 = arith.mulf %253, %252 : vector<8x128xf32>
    %cst_134 = arith.constant 5.000000e-01 : f32
    %255 = vector.broadcast %cst_134 : f32 to vector<8x128xf32>
    %256 = arith.addf %254, %255 : vector<8x128xf32>
    %257 = math.tanh %244 : vector<8x128xf32>
    %258 = arith.mulf %256, %257 : vector<8x128xf32>
    %c5_i32 = arith.constant 5 : i32
    %c8_i32_135 = arith.constant 8 : i32
    %259 = arith.muli %c5_i32, %c8_i32_135 : i32
    %260 = tpu.assume_multiple %259, 8 : i32
    %261 = arith.truncf %258 : vector<8x128xf32> to vector<8x128xbf16>
    %262 = arith.index_cast %260 : i32 to index
    %c0_136 = arith.constant 0 : index
    %263 = vector.load %arg5[%262, %c0_136] : memref<64x512xf32, #tpu.memory_space<vmem>>, vector<8x128xf32>
    %c0_137 = arith.constant 0 : index
    %c0_138 = arith.constant 0 : index
    %264 = vector.load %arg2[%c0_137, %c0_138] : memref<128x512xbf16, #tpu.memory_space<vmem>>, vector<128x128xbf16>
    %cst_139 = arith.constant dense<0.000000e+00> : vector<8x128xf32>
    %265 = tpu.matmul %261, %264, %cst_139 {dimension_numbers = #tpu.dot_dimension_numbers<[1], [0], [0], [1], [0, 0, 1, 1], [], []>} : vector<8x128xbf16>, vector<128x128xbf16>, vector<8x128xf32> -> vector<8x128xf32>
    %266 = arith.addf %263, %265 : vector<8x128xf32>
    %cst_140 = arith.constant 5.000000e-01 : f32
    %267 = vector.broadcast %cst_140 : f32 to vector<8x128xf32>
    %268 = arith.mulf %267, %266 : vector<8x128xf32>
    %269 = math.tanh %268 : vector<8x128xf32>
    %cst_141 = arith.constant 5.000000e-01 : f32
    %270 = vector.broadcast %cst_141 : f32 to vector<8x128xf32>
    %271 = arith.mulf %270, %269 : vector<8x128xf32>
    %cst_142 = arith.constant 5.000000e-01 : f32
    %272 = vector.broadcast %cst_142 : f32 to vector<8x128xf32>
    %273 = arith.addf %271, %272 : vector<8x128xf32>
    %274 = arith.index_cast %260 : i32 to index
    %c128_143 = arith.constant 128 : index
    %275 = vector.load %arg5[%274, %c128_143] : memref<64x512xf32, #tpu.memory_space<vmem>>, vector<8x128xf32>
    %c0_144 = arith.constant 0 : index
    %c128_145 = arith.constant 128 : index
    %276 = vector.load %arg2[%c0_144, %c128_145] : memref<128x512xbf16, #tpu.memory_space<vmem>>, vector<128x128xbf16>
    %cst_146 = arith.constant dense<0.000000e+00> : vector<8x128xf32>
    %277 = tpu.matmul %261, %276, %cst_146 {dimension_numbers = #tpu.dot_dimension_numbers<[1], [0], [0], [1], [0, 0, 1, 1], [], []>} : vector<8x128xbf16>, vector<128x128xbf16>, vector<8x128xf32> -> vector<8x128xf32>
    %278 = arith.addf %275, %277 : vector<8x128xf32>
    %cst_147 = arith.constant 5.000000e-01 : f32
    %279 = vector.broadcast %cst_147 : f32 to vector<8x128xf32>
    %280 = arith.mulf %279, %278 : vector<8x128xf32>
    %281 = math.tanh %280 : vector<8x128xf32>
    %cst_148 = arith.constant 5.000000e-01 : f32
    %282 = vector.broadcast %cst_148 : f32 to vector<8x128xf32>
    %283 = arith.mulf %282, %281 : vector<8x128xf32>
    %cst_149 = arith.constant 5.000000e-01 : f32
    %284 = vector.broadcast %cst_149 : f32 to vector<8x128xf32>
    %285 = arith.addf %283, %284 : vector<8x128xf32>
    %286 = arith.index_cast %260 : i32 to index
    %c256_150 = arith.constant 256 : index
    %287 = vector.load %arg5[%286, %c256_150] : memref<64x512xf32, #tpu.memory_space<vmem>>, vector<8x128xf32>
    %c0_151 = arith.constant 0 : index
    %c256_152 = arith.constant 256 : index
    %288 = vector.load %arg2[%c0_151, %c256_152] : memref<128x512xbf16, #tpu.memory_space<vmem>>, vector<128x128xbf16>
    %cst_153 = arith.constant dense<0.000000e+00> : vector<8x128xf32>
    %289 = tpu.matmul %261, %288, %cst_153 {dimension_numbers = #tpu.dot_dimension_numbers<[1], [0], [0], [1], [0, 0, 1, 1], [], []>} : vector<8x128xbf16>, vector<128x128xbf16>, vector<8x128xf32> -> vector<8x128xf32>
    %290 = arith.addf %287, %289 : vector<8x128xf32>
    %291 = math.tanh %290 : vector<8x128xf32>
    %292 = arith.mulf %285, %244 : vector<8x128xf32>
    %293 = arith.mulf %273, %291 : vector<8x128xf32>
    %294 = arith.addf %292, %293 : vector<8x128xf32>
    %295 = arith.index_cast %260 : i32 to index
    %c384_154 = arith.constant 384 : index
    %296 = vector.load %arg5[%295, %c384_154] : memref<64x512xf32, #tpu.memory_space<vmem>>, vector<8x128xf32>
    %c0_155 = arith.constant 0 : index
    %c384_156 = arith.constant 384 : index
    %297 = vector.load %arg2[%c0_155, %c384_156] : memref<128x512xbf16, #tpu.memory_space<vmem>>, vector<128x128xbf16>
    %cst_157 = arith.constant dense<0.000000e+00> : vector<8x128xf32>
    %298 = tpu.matmul %261, %297, %cst_157 {dimension_numbers = #tpu.dot_dimension_numbers<[1], [0], [0], [1], [0, 0, 1, 1], [], []>} : vector<8x128xbf16>, vector<128x128xbf16>, vector<8x128xf32> -> vector<8x128xf32>
    %299 = arith.addf %296, %298 : vector<8x128xf32>
    %cst_158 = arith.constant 5.000000e-01 : f32
    %300 = vector.broadcast %cst_158 : f32 to vector<8x128xf32>
    %301 = arith.mulf %300, %299 : vector<8x128xf32>
    %302 = math.tanh %301 : vector<8x128xf32>
    %cst_159 = arith.constant 5.000000e-01 : f32
    %303 = vector.broadcast %cst_159 : f32 to vector<8x128xf32>
    %304 = arith.mulf %303, %302 : vector<8x128xf32>
    %cst_160 = arith.constant 5.000000e-01 : f32
    %305 = vector.broadcast %cst_160 : f32 to vector<8x128xf32>
    %306 = arith.addf %304, %305 : vector<8x128xf32>
    %307 = math.tanh %294 : vector<8x128xf32>
    %308 = arith.mulf %306, %307 : vector<8x128xf32>
    %c6_i32 = arith.constant 6 : i32
    %c8_i32_161 = arith.constant 8 : i32
    %309 = arith.muli %c6_i32, %c8_i32_161 : i32
    %310 = tpu.assume_multiple %309, 8 : i32
    %311 = arith.truncf %308 : vector<8x128xf32> to vector<8x128xbf16>
    %312 = arith.index_cast %310 : i32 to index
    %c0_162 = arith.constant 0 : index
    %313 = vector.load %arg5[%312, %c0_162] : memref<64x512xf32, #tpu.memory_space<vmem>>, vector<8x128xf32>
    %c0_163 = arith.constant 0 : index
    %c0_164 = arith.constant 0 : index
    %314 = vector.load %arg2[%c0_163, %c0_164] : memref<128x512xbf16, #tpu.memory_space<vmem>>, vector<128x128xbf16>
    %cst_165 = arith.constant dense<0.000000e+00> : vector<8x128xf32>
    %315 = tpu.matmul %311, %314, %cst_165 {dimension_numbers = #tpu.dot_dimension_numbers<[1], [0], [0], [1], [0, 0, 1, 1], [], []>} : vector<8x128xbf16>, vector<128x128xbf16>, vector<8x128xf32> -> vector<8x128xf32>
    %316 = arith.addf %313, %315 : vector<8x128xf32>
    %cst_166 = arith.constant 5.000000e-01 : f32
    %317 = vector.broadcast %cst_166 : f32 to vector<8x128xf32>
    %318 = arith.mulf %317, %316 : vector<8x128xf32>
    %319 = math.tanh %318 : vector<8x128xf32>
    %cst_167 = arith.constant 5.000000e-01 : f32
    %320 = vector.broadcast %cst_167 : f32 to vector<8x128xf32>
    %321 = arith.mulf %320, %319 : vector<8x128xf32>
    %cst_168 = arith.constant 5.000000e-01 : f32
    %322 = vector.broadcast %cst_168 : f32 to vector<8x128xf32>
    %323 = arith.addf %321, %322 : vector<8x128xf32>
    %324 = arith.index_cast %310 : i32 to index
    %c128_169 = arith.constant 128 : index
    %325 = vector.load %arg5[%324, %c128_169] : memref<64x512xf32, #tpu.memory_space<vmem>>, vector<8x128xf32>
    %c0_170 = arith.constant 0 : index
    %c128_171 = arith.constant 128 : index
    %326 = vector.load %arg2[%c0_170, %c128_171] : memref<128x512xbf16, #tpu.memory_space<vmem>>, vector<128x128xbf16>
    %cst_172 = arith.constant dense<0.000000e+00> : vector<8x128xf32>
    %327 = tpu.matmul %311, %326, %cst_172 {dimension_numbers = #tpu.dot_dimension_numbers<[1], [0], [0], [1], [0, 0, 1, 1], [], []>} : vector<8x128xbf16>, vector<128x128xbf16>, vector<8x128xf32> -> vector<8x128xf32>
    %328 = arith.addf %325, %327 : vector<8x128xf32>
    %cst_173 = arith.constant 5.000000e-01 : f32
    %329 = vector.broadcast %cst_173 : f32 to vector<8x128xf32>
    %330 = arith.mulf %329, %328 : vector<8x128xf32>
    %331 = math.tanh %330 : vector<8x128xf32>
    %cst_174 = arith.constant 5.000000e-01 : f32
    %332 = vector.broadcast %cst_174 : f32 to vector<8x128xf32>
    %333 = arith.mulf %332, %331 : vector<8x128xf32>
    %cst_175 = arith.constant 5.000000e-01 : f32
    %334 = vector.broadcast %cst_175 : f32 to vector<8x128xf32>
    %335 = arith.addf %333, %334 : vector<8x128xf32>
    %336 = arith.index_cast %310 : i32 to index
    %c256_176 = arith.constant 256 : index
    %337 = vector.load %arg5[%336, %c256_176] : memref<64x512xf32, #tpu.memory_space<vmem>>, vector<8x128xf32>
    %c0_177 = arith.constant 0 : index
    %c256_178 = arith.constant 256 : index
    %338 = vector.load %arg2[%c0_177, %c256_178] : memref<128x512xbf16, #tpu.memory_space<vmem>>, vector<128x128xbf16>
    %cst_179 = arith.constant dense<0.000000e+00> : vector<8x128xf32>
    %339 = tpu.matmul %311, %338, %cst_179 {dimension_numbers = #tpu.dot_dimension_numbers<[1], [0], [0], [1], [0, 0, 1, 1], [], []>} : vector<8x128xbf16>, vector<128x128xbf16>, vector<8x128xf32> -> vector<8x128xf32>
    %340 = arith.addf %337, %339 : vector<8x128xf32>
    %341 = math.tanh %340 : vector<8x128xf32>
    %342 = arith.mulf %335, %294 : vector<8x128xf32>
    %343 = arith.mulf %323, %341 : vector<8x128xf32>
    %344 = arith.addf %342, %343 : vector<8x128xf32>
    %345 = arith.index_cast %310 : i32 to index
    %c384_180 = arith.constant 384 : index
    %346 = vector.load %arg5[%345, %c384_180] : memref<64x512xf32, #tpu.memory_space<vmem>>, vector<8x128xf32>
    %c0_181 = arith.constant 0 : index
    %c384_182 = arith.constant 384 : index
    %347 = vector.load %arg2[%c0_181, %c384_182] : memref<128x512xbf16, #tpu.memory_space<vmem>>, vector<128x128xbf16>
    %cst_183 = arith.constant dense<0.000000e+00> : vector<8x128xf32>
    %348 = tpu.matmul %311, %347, %cst_183 {dimension_numbers = #tpu.dot_dimension_numbers<[1], [0], [0], [1], [0, 0, 1, 1], [], []>} : vector<8x128xbf16>, vector<128x128xbf16>, vector<8x128xf32> -> vector<8x128xf32>
    %349 = arith.addf %346, %348 : vector<8x128xf32>
    %cst_184 = arith.constant 5.000000e-01 : f32
    %350 = vector.broadcast %cst_184 : f32 to vector<8x128xf32>
    %351 = arith.mulf %350, %349 : vector<8x128xf32>
    %352 = math.tanh %351 : vector<8x128xf32>
    %cst_185 = arith.constant 5.000000e-01 : f32
    %353 = vector.broadcast %cst_185 : f32 to vector<8x128xf32>
    %354 = arith.mulf %353, %352 : vector<8x128xf32>
    %cst_186 = arith.constant 5.000000e-01 : f32
    %355 = vector.broadcast %cst_186 : f32 to vector<8x128xf32>
    %356 = arith.addf %354, %355 : vector<8x128xf32>
    %357 = math.tanh %344 : vector<8x128xf32>
    %358 = arith.mulf %356, %357 : vector<8x128xf32>
    %c7_i32 = arith.constant 7 : i32
    %c8_i32_187 = arith.constant 8 : i32
    %359 = arith.muli %c7_i32, %c8_i32_187 : i32
    %360 = tpu.assume_multiple %359, 8 : i32
    %361 = arith.truncf %358 : vector<8x128xf32> to vector<8x128xbf16>
    %362 = arith.index_cast %360 : i32 to index
    %c0_188 = arith.constant 0 : index
    %363 = vector.load %arg5[%362, %c0_188] : memref<64x512xf32, #tpu.memory_space<vmem>>, vector<8x128xf32>
    %c0_189 = arith.constant 0 : index
    %c0_190 = arith.constant 0 : index
    %364 = vector.load %arg2[%c0_189, %c0_190] : memref<128x512xbf16, #tpu.memory_space<vmem>>, vector<128x128xbf16>
    %cst_191 = arith.constant dense<0.000000e+00> : vector<8x128xf32>
    %365 = tpu.matmul %361, %364, %cst_191 {dimension_numbers = #tpu.dot_dimension_numbers<[1], [0], [0], [1], [0, 0, 1, 1], [], []>} : vector<8x128xbf16>, vector<128x128xbf16>, vector<8x128xf32> -> vector<8x128xf32>
    %366 = arith.addf %363, %365 : vector<8x128xf32>
    %cst_192 = arith.constant 5.000000e-01 : f32
    %367 = vector.broadcast %cst_192 : f32 to vector<8x128xf32>
    %368 = arith.mulf %367, %366 : vector<8x128xf32>
    %369 = math.tanh %368 : vector<8x128xf32>
    %cst_193 = arith.constant 5.000000e-01 : f32
    %370 = vector.broadcast %cst_193 : f32 to vector<8x128xf32>
    %371 = arith.mulf %370, %369 : vector<8x128xf32>
    %cst_194 = arith.constant 5.000000e-01 : f32
    %372 = vector.broadcast %cst_194 : f32 to vector<8x128xf32>
    %373 = arith.addf %371, %372 : vector<8x128xf32>
    %374 = arith.index_cast %360 : i32 to index
    %c128_195 = arith.constant 128 : index
    %375 = vector.load %arg5[%374, %c128_195] : memref<64x512xf32, #tpu.memory_space<vmem>>, vector<8x128xf32>
    %c0_196 = arith.constant 0 : index
    %c128_197 = arith.constant 128 : index
    %376 = vector.load %arg2[%c0_196, %c128_197] : memref<128x512xbf16, #tpu.memory_space<vmem>>, vector<128x128xbf16>
    %cst_198 = arith.constant dense<0.000000e+00> : vector<8x128xf32>
    %377 = tpu.matmul %361, %376, %cst_198 {dimension_numbers = #tpu.dot_dimension_numbers<[1], [0], [0], [1], [0, 0, 1, 1], [], []>} : vector<8x128xbf16>, vector<128x128xbf16>, vector<8x128xf32> -> vector<8x128xf32>
    %378 = arith.addf %375, %377 : vector<8x128xf32>
    %cst_199 = arith.constant 5.000000e-01 : f32
    %379 = vector.broadcast %cst_199 : f32 to vector<8x128xf32>
    %380 = arith.mulf %379, %378 : vector<8x128xf32>
    %381 = math.tanh %380 : vector<8x128xf32>
    %cst_200 = arith.constant 5.000000e-01 : f32
    %382 = vector.broadcast %cst_200 : f32 to vector<8x128xf32>
    %383 = arith.mulf %382, %381 : vector<8x128xf32>
    %cst_201 = arith.constant 5.000000e-01 : f32
    %384 = vector.broadcast %cst_201 : f32 to vector<8x128xf32>
    %385 = arith.addf %383, %384 : vector<8x128xf32>
    %386 = arith.index_cast %360 : i32 to index
    %c256_202 = arith.constant 256 : index
    %387 = vector.load %arg5[%386, %c256_202] : memref<64x512xf32, #tpu.memory_space<vmem>>, vector<8x128xf32>
    %c0_203 = arith.constant 0 : index
    %c256_204 = arith.constant 256 : index
    %388 = vector.load %arg2[%c0_203, %c256_204] : memref<128x512xbf16, #tpu.memory_space<vmem>>, vector<128x128xbf16>
    %cst_205 = arith.constant dense<0.000000e+00> : vector<8x128xf32>
    %389 = tpu.matmul %361, %388, %cst_205 {dimension_numbers = #tpu.dot_dimension_numbers<[1], [0], [0], [1], [0, 0, 1, 1], [], []>} : vector<8x128xbf16>, vector<128x128xbf16>, vector<8x128xf32> -> vector<8x128xf32>
    %390 = arith.addf %387, %389 : vector<8x128xf32>
    %391 = math.tanh %390 : vector<8x128xf32>
    %392 = arith.mulf %385, %344 : vector<8x128xf32>
    %393 = arith.mulf %373, %391 : vector<8x128xf32>
    %394 = arith.addf %392, %393 : vector<8x128xf32>
    %395 = arith.index_cast %360 : i32 to index
    %c384_206 = arith.constant 384 : index
    %396 = vector.load %arg5[%395, %c384_206] : memref<64x512xf32, #tpu.memory_space<vmem>>, vector<8x128xf32>
    %c0_207 = arith.constant 0 : index
    %c384_208 = arith.constant 384 : index
    %397 = vector.load %arg2[%c0_207, %c384_208] : memref<128x512xbf16, #tpu.memory_space<vmem>>, vector<128x128xbf16>
    %cst_209 = arith.constant dense<0.000000e+00> : vector<8x128xf32>
    %398 = tpu.matmul %361, %397, %cst_209 {dimension_numbers = #tpu.dot_dimension_numbers<[1], [0], [0], [1], [0, 0, 1, 1], [], []>} : vector<8x128xbf16>, vector<128x128xbf16>, vector<8x128xf32> -> vector<8x128xf32>
    %399 = arith.addf %396, %398 : vector<8x128xf32>
    %cst_210 = arith.constant 5.000000e-01 : f32
    %400 = vector.broadcast %cst_210 : f32 to vector<8x128xf32>
    %401 = arith.mulf %400, %399 : vector<8x128xf32>
    %402 = math.tanh %401 : vector<8x128xf32>
    %cst_211 = arith.constant 5.000000e-01 : f32
    %403 = vector.broadcast %cst_211 : f32 to vector<8x128xf32>
    %404 = arith.mulf %403, %402 : vector<8x128xf32>
    %cst_212 = arith.constant 5.000000e-01 : f32
    %405 = vector.broadcast %cst_212 : f32 to vector<8x128xf32>
    %406 = arith.addf %404, %405 : vector<8x128xf32>
    %407 = math.tanh %394 : vector<8x128xf32>
    %408 = arith.mulf %406, %407 : vector<8x128xf32>
    %c8_i32_213 = arith.constant 8 : i32
    %c0_214 = arith.constant 0 : index
    %c0_215 = arith.constant 0 : index
    %409 = vector.load %arg4[%c0_214, %c0_215] : memref<8x128xf32, #tpu.memory_space<vmem>>, vector<8x128xf32>
    tpu.vector_store %arg4[%c0_214, %c0_215], %408 {strides = array<i32>} : memref<8x128xf32, #tpu.memory_space<vmem>>, vector<8x128xf32>,
    return
  }
}

</mosaic_0001>

<llo_original>
// kernel: tpu_custom_call.1
$region0: #{tpu_custom_call.1}
  #allocation0 [shape = 'u32[]', space=smem, size = 0x4, offset = 0x4, fixed_abs, tag = 'smem constant byte address 0x4 - core index']
  #allocation1 [shape = 'u32[144,128]{1,0:T(1,128)}', space=vmem, size = 0x12000, scoped, tag = 'internal scratch']
  #allocation2 [shape = 'f32[64,512]{1,0:T(8,128)}', space=vmem, size = 0x20000, scoped, tag = 'scratch operand']
  %s0 = inlined_call_operand.hbm [shape: f32[64,128], index: 0, kind: input, shape index: {}]
  %s1 = inlined_call_operand.hbm [shape: f32[128,512], index: 1, kind: input, shape index: {}]
  %s2 = inlined_call_operand.hbm [shape: bf16[128,512], index: 2, kind: input, shape index: {}]
  %s3 = inlined_call_operand.vmem [shape: f32[1,512], index: 3, kind: input, shape index: {}]
  %s4 = inlined_call_operand.hbm [shape: f32[8,128], index: 4, kind: output, shape index: {}]
  %s5 = sld [smem:[#allocation0]]
  $region38: #{tpu_custom_call.1} parent=0
    _
  %s7 = ssub.s32 1, %s5
  %s8 = scalar_select 0, %s7, %s5
  $region1: #{tpu_custom_call.1} parent=0
    #allocation3 [shape = 'u8[32768]{0}', space=vmem, size = 0x8000, scoped, tag = 'input window, operand 0, single buffered']
    #allocation4 [shape = 's32[1]{0}', space=sflag, size = 0x4, scoped, tag = 'scoped memory for tpu_custom_call.1']
    #allocation5 [shape = 's32[1]{0}', space=sflag, size = 0x4, scoped, tag = 'scoped memory for tpu_custom_call.1']
    #allocation6 [shape = 'u8[262144]{0}', space=vmem, size = 0x40000, scoped, tag = 'input window, operand 1, single buffered']
    #allocation7 [shape = 's32[1]{0}', space=sflag, size = 0x4, scoped, tag = 'scoped memory for tpu_custom_call.1']
    #allocation8 [shape = 'u8[131072]{0}', space=vmem, size = 0x20000, scoped, tag = 'input window, operand 2, single buffered']
    #allocation9 [shape = 'u8[4096]{0}', space=vmem, size = 0x1000, scoped, tag = 'output window, operand 0, single buffered']
    %9 = vsyncpa [#allocation4], 0
    %10 = vsyncpa [#allocation7], 0
    %11 = vsyncpa [#allocation5], 0
    // Predicated region
    $region2: #{tpu_custom_call.1} parent=1 // pred_check
      _
    $region3: #{tpu_custom_call.1} parent=1 // pred_check_branch
      %13 = sbr.rel (0) target = $region5
    $region4: #{tpu_custom_call.1} parent=1 // pred_region
      %s15 = ssub.s32 1024, 1024
      %16 = vsyncadd [#allocation4], %s15
      %s17 = sshll.u32 [#allocation3], 4
      %s18 = int_to_ptr.vmem [resolvable:$true] %s17
      %23 = dma.hbm_to_vmem [thread:$0]  %s0, 1024, %s18, [#allocation4], 128, 128, 8
    $region5: #{tpu_custom_call.1} parent=1 // pred_fallthru
      _
    // Predicated region
    $region6: #{tpu_custom_call.1} parent=1 // pred_check
      _
    $region7: #{tpu_custom_call.1} parent=1 // pred_check_branch
      %25 = sbr.rel (0) target = $region9
    $region8: #{tpu_custom_call.1} parent=1 // pred_region
      %s27 = ssub.s32 8192, 8192
      %28 = vsyncadd [#allocation7], %s27
      %s29 = sshll.u32 [#allocation6], 4
      %s30 = int_to_ptr.vmem [resolvable:$true] %s29
      %35 = dma.hbm_to_vmem [thread:$0]  %s1, 8192, %s30, [#allocation7], 512, 512, 32
    $region9: #{tpu_custom_call.1} parent=1 // pred_fallthru
      _
    // Predicated region
    $region10: #{tpu_custom_call.1} parent=1 // pred_check
      _
    $region11: #{tpu_custom_call.1} parent=1 // pred_check_branch
      %37 = sbr.rel (0) target = $region13
    $region12: #{tpu_custom_call.1} parent=1 // pred_region
      %s39 = ssub.s32 4096, 4096
      %40 = vsyncadd [#allocation7], %s39
      %s41 = sshll.u32 [#allocation8], 4
      %s42 = int_to_ptr.vmem [resolvable:$true] %s41
      %47 = dma.hbm_to_vmem [thread:$0]  %s2, 4096, %s42, [#allocation7], 256, 256, 16
    $region13: #{tpu_custom_call.1} parent=1 // pred_fallthru
      _
    // Predicated region
    $region14: #{tpu_custom_call.1} parent=1 // pred_check
      _
    $region15: #{tpu_custom_call.1} parent=1 // pred_check_branch
      %49 = sbr.rel (0) target = $region17
    $region16: #{tpu_custom_call.1} parent=1 // pred_region
      _
    $region17: #{tpu_custom_call.1} parent=1 // pred_fallthru
      _
    // Predicated region
    $region18: #{tpu_custom_call.1} parent=1 // pred_check
      _
    $region19: #{tpu_custom_call.1} parent=1 // pred_check_branch
      %51 = sbr.rel (0) target = $region21
    $region20: #{tpu_custom_call.1} parent=1 // pred_region
      %52 = dma.done [#allocation4], 1024
    $region21: #{tpu_custom_call.1} parent=1 // pred_fallthru
      _
    // Predicated region
    $region22: #{tpu_custom_call.1} parent=1 // pred_check
      _
    $region23: #{tpu_custom_call.1} parent=1 // pred_check_branch
      %54 = sbr.rel (0) target = $region25
    $region24: #{tpu_custom_call.1} parent=1 // pred_region
      %55 = dma.done [#allocation7], 8192
    $region25: #{tpu_custom_call.1} parent=1 // pred_fallthru
      _
    // Predicated region
    $region26: #{tpu_custom_call.1} parent=1 // pred_check
      _
    $region27: #{tpu_custom_call.1} parent=1 // pred_check_branch
      %57 = sbr.rel (0) target = $region29
    $region28: #{tpu_custom_call.1} parent=1 // pred_region
      %58 = dma.done [#allocation7], 4096
    $region29: #{tpu_custom_call.1} parent=1 // pred_fallthru
      _
    %v60 = vld [vmem:[#allocation3] sm:$0xff]
    %v61 = vld [vmem:[#allocation3 + $0x8] sm:$0xff]
    %v62 = vld [vmem:[#allocation3 + $0x10] sm:$0xff]
    %v63 = vld [vmem:[#allocation3 + $0x18] sm:$0xff]
    %v64 = vld [vmem:[#allocation3 + $0x20] sm:$0xff]
    %v65 = vld [vmem:[#allocation3 + $0x28] sm:$0xff]
    %v66 = vld [vmem:[#allocation3 + $0x30] sm:$0xff]
    %v67 = vld [vmem:[#allocation3 + $0x38] sm:$0xff]
    %v68 = vld [vmem:[#allocation6] sm:$0xff]
    %v69 = vld [vmem:[#allocation6 + $0x8] sm:$0xff]
    %v70 = vld [vmem:[#allocation6 + $0x10] sm:$0xff]
    %v71 = vld [vmem:[#allocation6 + $0x18] sm:$0xff]
    %v72 = vld [vmem:[#allocation6 + $0x20] sm:$0xff]
    %v73 = vld [vmem:[#allocation6 + $0x28] sm:$0xff]
    %v74 = vld [vmem:[#allocation6 + $0x30] sm:$0xff]
    %v75 = vld [vmem:[#allocation6 + $0x38] sm:$0xff]
    %v76 = vld [vmem:[#allocation6 + $0x40] sm:$0xff]
    %v77 = vld [vmem:[#allocation6 + $0x48] sm:$0xff]
    %v78 = vld [vmem:[#allocation6 + $0x50] sm:$0xff]
    %v79 = vld [vmem:[#allocation6 + $0x58] sm:$0xff]
    %v80 = vld [vmem:[#allocation6 + $0x60] sm:$0xff]
    %v81 = vld [vmem:[#allocation6 + $0x68] sm:$0xff]
    %v82 = vld [vmem:[#allocation6 + $0x70] sm:$0xff]
    %v83 = vld [vmem:[#allocation6 + $0x78] sm:$0xff]
    %v84 = vld [vmem:[#allocation6 + $0x80] sm:$0xff]
    %v85 = vld [vmem:[#allocation6 + $0x88] sm:$0xff]
    %v86 = vld [vmem:[#allocation6 + $0x90] sm:$0xff]
    %v87 = vld [vmem:[#allocation6 + $0x98] sm:$0xff]
    %v88 = vld [vmem:[#allocation6 + $0xa0] sm:$0xff]
    %v89 = vld [vmem:[#allocation6 + $0xa8] sm:$0xff]
    %v90 = vld [vmem:[#allocation6 + $0xb0] sm:$0xff]
    %v91 = vld [vmem:[#allocation6 + $0xb8] sm:$0xff]
    %v92 = vld [vmem:[#allocation6 + $0xc0] sm:$0xff]
    %v93 = vld [vmem:[#allocation6 + $0xc8] sm:$0xff]
    %v94 = vld [vmem:[#allocation6 + $0xd0] sm:$0xff]
    %v95 = vld [vmem:[#allocation6 + $0xd8] sm:$0xff]
    %v96 = vld [vmem:[#allocation6 + $0xe0] sm:$0xff]
    %v97 = vld [vmem:[#allocation6 + $0xe8] sm:$0xff]
    %v98 = vld [vmem:[#allocation6 + $0xf0] sm:$0xff]
    %v99 = vld [vmem:[#allocation6 + $0xf8] sm:$0xff]
    %v100 = vld [vmem:[#allocation6 + $0x100] sm:$0xff]
    %v101 = vld [vmem:[#allocation6 + $0x108] sm:$0xff]
    %v102 = vld [vmem:[#allocation6 + $0x110] sm:$0xff]
    %v103 = vld [vmem:[#allocation6 + $0x118] sm:$0xff]
    %v104 = vld [vmem:[#allocation6 + $0x120] sm:$0xff]
    %v105 = vld [vmem:[#allocation6 + $0x128] sm:$0xff]
    %v106 = vld [vmem:[#allocation6 + $0x130] sm:$0xff]
    %v107 = vld [vmem:[#allocation6 + $0x138] sm:$0xff]
    %v108 = vld [vmem:[#allocation6 + $0x140] sm:$0xff]
    %v109 = vld [vmem:[#allocation6 + $0x148] sm:$0xff]
    %v110 = vld [vmem:[#allocation6 + $0x150] sm:$0xff]
    %v111 = vld [vmem:[#allocation6 + $0x158] sm:$0xff]
    %v112 = vld [vmem:[#allocation6 + $0x160] sm:$0xff]
    %v113 = vld [vmem:[#allocation6 + $0x168] sm:$0xff]
    %v114 = vld [vmem:[#allocation6 + $0x170] sm:$0xff]
    %v115 = vld [vmem:[#allocation6 + $0x178] sm:$0xff]
    %v116 = vld [vmem:[#allocation6 + $0x180] sm:$0xff]
    %v117 = vld [vmem:[#allocation6 + $0x188] sm:$0xff]
    %v118 = vld [vmem:[#allocation6 + $0x190] sm:$0xff]
    %v119 = vld [vmem:[#allocation6 + $0x198] sm:$0xff]
    %v120 = vld [vmem:[#allocation6 + $0x1a0] sm:$0xff]
    %v121 = vld [vmem:[#allocation6 + $0x1a8] sm:$0xff]
    %v122 = vld [vmem:[#allocation6 + $0x1b0] sm:$0xff]
    %v123 = vld [vmem:[#allocation6 + $0x1b8] sm:$0xff]
    %v124 = vld [vmem:[#allocation6 + $0x1c0] sm:$0xff]
    %v125 = vld [vmem:[#allocation6 + $0x1c8] sm:$0xff]
    %v126 = vld [vmem:[#allocation6 + $0x1d0] sm:$0xff]
    %v127 = vld [vmem:[#allocation6 + $0x1d8] sm:$0xff]
    %v128 = vld [vmem:[#allocation6 + $0x1e0] sm:$0xff]
    %v129 = vld [vmem:[#allocation6 + $0x1e8] sm:$0xff]
    %v130 = vld [vmem:[#allocation6 + $0x1f0] sm:$0xff]
    %v131 = vld [vmem:[#allocation6 + $0x1f8] sm:$0xff]
    %v132 = vld [vmem:[%s3] sm:$0xf]
    %v134 = vlaneseq
    %v135 = vshrl.u32 %v134, 7
    %v136 = vsub.s32 0, %v135
    %v137 = vrot.slane %v132, %v136
    %v138 = vlaneseq
    %v139 = vshrl.u32 %v138, 7
    %v140 = vsub.s32 1, %v139
    %v141 = vrot.slane %v132, %v140
    %v142 = vlaneseq
    %v143 = vshrl.u32 %v142, 7
    %v144 = vsub.s32 2, %v143
    %v145 = vrot.slane %v132, %v144
    %v146 = vlaneseq
    %v147 = vshrl.u32 %v146, 7
    %v148 = vsub.s32 3, %v147
    %v149 = vrot.slane %v132, %v148
    %154 = vmatprep.subr.mxu0 %v129
    %155 = vmatpush1.msra.mxu0 %v128
    %156 = vmatprep.subr.mxu0 %v125
    %157 = vmatpush1.msra.mxu0 %v124
    %158 = vmatprep.subr.mxu0 %v121
    %159 = vmatpush1.msra.mxu0 %v120
    %160 = vmatprep.subr.mxu0 %v117
    %161 = vmatpush1.msra.mxu0 %v116
    %162 = vmatprep.subr.mxu0 %v113
    %163 = vmatpush1.msra.mxu0 %v112
    %164 = vmatprep.subr.mxu0 %v109
    %165 = vmatpush1.msra.mxu0 %v108
    %166 = vmatprep.subr.mxu0 %v105
    %167 = vmatpush1.msra.mxu0 %v104
    %168 = vmatprep.subr.mxu0 %v101
    %169 = vmatpush1.msra.mxu0 %v100
    %170 = vmatprep.subr.mxu0 %v97
    %171 = vmatpush1.msra.mxu0 %v96
    %172 = vmatprep.subr.mxu0 %v93
    %173 = vmatpush1.msra.mxu0 %v92
    %174 = vmatprep.subr.mxu0 %v89
    %175 = vmatpush1.msra.mxu0 %v88
    %176 = vmatprep.subr.mxu0 %v85
    %177 = vmatpush1.msra.mxu0 %v84
    %178 = vmatprep.subr.mxu0 %v81
    %179 = vmatpush1.msra.mxu0 %v80
    %180 = vmatprep.subr.mxu0 %v77
    %181 = vmatpush1.msra.mxu0 %v76
    %182 = vmatprep.subr.mxu0 %v73
    %183 = vmatpush1.msra.mxu0 %v72
    %184 = vmatprep.subr.mxu0 %v69
    %185 = vmatpush1.msra.mxu0 %v68
    %186 = vmatprep.subr.mxu0 0.0
    %187 = vmatpush2.msra.mxu0 0.0
    %188 = vmatprep.subr.mxu0 0.0
    %189 = vmatpush2.msra.mxu0 0.0
    %190 = vmatprep.subr.mxu0 0.0
    %191 = vmatpush2.msra.mxu0 0.0
    %192 = vmatprep.subr.mxu0 0.0
    %193 = vmatpush2.msra.mxu0 0.0
    %194 = vmatprep.subr.mxu0 0.0
    %195 = vmatpush2.msra.mxu0 0.0
    %196 = vmatprep.subr.mxu0 0.0
    %197 = vmatpush2.msra.mxu0 0.0
    %198 = vmatprep.subr.mxu0 0.0
    %199 = vmatpush2.msra.mxu0 0.0
    %200 = vmatprep.subr.mxu0 0.0
    %201 = vmatpush2.msra.mxu0 0.0
    %202 = vmatprep.subr.mxu0 0.0
    %203 = vmatpush2.msra.mxu0 0.0
    %204 = vmatprep.subr.mxu0 0.0
    %205 = vmatpush2.msra.mxu0 0.0
    %206 = vmatprep.subr.mxu0 0.0
    %207 = vmatpush2.msra.mxu0 0.0
    %208 = vmatprep.subr.mxu0 0.0
    %209 = vmatpush2.msra.mxu0 0.0
    %210 = vmatprep.subr.mxu0 0.0
    %211 = vmatpush2.msra.mxu0 0.0
    %212 = vmatprep.subr.mxu0 0.0
    %213 = vmatpush2.msra.mxu0 0.0
    %214 = vmatprep.subr.mxu0 0.0
    %215 = vmatpush2.msra.mxu0 0.0
    %216 = vmatprep.subr.mxu0 0.0
    %217 = vmatpush2.msra.mxu0 0.0
    %218 = vmatprep.mubr.f32.mxu0 0.0
    %219 = vmatmul.mubr.f32.gmra.mxu0 %v60
    %v220 = vpop.f32.mrf.mxu0
    %v221 = vadd.f32 %v137, %v220
    %v222 = vpop.f32.mrf.mxu0
    %v223 = vadd.f32 %v141, %v222
    %224 = vmatprep.mubr.f32.mxu0 0.0
    %225 = vmatmul.mubr.f32.gmra.mxu0 %v61
    %v226 = vpop.f32.mrf.mxu0
    %v227 = vadd.f32 %v137, %v226
    %v228 = vpop.f32.mrf.mxu0
    %v229 = vadd.f32 %v141, %v228
    %230 = vmatprep.mubr.f32.mxu0 0.0
    %231 = vmatmul.mubr.f32.gmra.mxu0 %v62
    %v232 = vpop.f32.mrf.mxu0
    %v233 = vadd.f32 %v137, %v232
    %v234 = vpop.f32.mrf.mxu0
    %v235 = vadd.f32 %v141, %v234
    %236 = vmatprep.mubr.f32.mxu0 0.0
    %237 = vmatmul.mubr.f32.gmra.mxu0 %v63
    %v238 = vpop.f32.mrf.mxu0
    %v239 = vadd.f32 %v137, %v238
    %v240 = vpop.f32.mrf.mxu0
    %v241 = vadd.f32 %v141, %v240
    %242 = vmatprep.mubr.f32.mxu0 0.0
    %243 = vmatmul.mubr.f32.gmra.mxu0 %v64
    %v244 = vpop.f32.mrf.mxu0
    %v245 = vadd.f32 %v137, %v244
    %v246 = vpop.f32.mrf.mxu0
    %v247 = vadd.f32 %v141, %v246
    %248 = vmatprep.mubr.f32.mxu0 0.0
    %249 = vmatmul.mubr.f32.gmra.mxu0 %v65
    %v250 = vpop.f32.mrf.mxu0
    %v251 = vadd.f32 %v137, %v250
    %v252 = vpop.f32.mrf.mxu0
    %v253 = vadd.f32 %v141, %v252
    %254 = vmatprep.mubr.f32.mxu0 0.0
    %255 = vmatmul.mubr.f32.gmra.mxu0 %v66
    %v256 = vpop.f32.mrf.mxu0
    %v257 = vadd.f32 %v137, %v256
    %v258 = vpop.f32.mrf.mxu0
    %v259 = vadd.f32 %v141, %v258
    %260 = vmatprep.mubr.f32.mxu0 0.0
    %261 = vmatmul.mubr.f32.gmra.mxu0 %v67
    %v262 = vpop.f32.mrf.mxu0
    %v263 = vadd.f32 %v137, %v262
    %v264 = vpop.f32.mrf.mxu0
    %v265 = vadd.f32 %v141, %v264
    %266 = vdwg.mxu0
    %267 = vmatprep.subr.mxu0 %v131
    %268 = vmatpush1.msra.mxu0 %v130
    %269 = vmatprep.subr.mxu0 %v127
    %270 = vmatpush1.msra.mxu0 %v126
    %271 = vmatprep.subr.mxu0 %v123
    %272 = vmatpush1.msra.mxu0 %v122
    %273 = vmatprep.subr.mxu0 %v119
    %274 = vmatpush1.msra.mxu0 %v118
    %275 = vmatprep.subr.mxu0 %v115
    %276 = vmatpush1.msra.mxu0 %v114
    %277 = vmatprep.subr.mxu0 %v111
    %278 = vmatpush1.msra.mxu0 %v110
    %279 = vmatprep.subr.mxu0 %v107
    %280 = vmatpush1.msra.mxu0 %v106
    %281 = vmatprep.subr.mxu0 %v103
    %282 = vmatpush1.msra.mxu0 %v102
    %283 = vmatprep.subr.mxu0 %v99
    %284 = vmatpush1.msra.mxu0 %v98
    %285 = vmatprep.subr.mxu0 %v95
    %286 = vmatpush1.msra.mxu0 %v94
    %287 = vmatprep.subr.mxu0 %v91
    %288 = vmatpush1.msra.mxu0 %v90
    %289 = vmatprep.subr.mxu0 %v87
    %290 = vmatpush1.msra.mxu0 %v86
    %291 = vmatprep.subr.mxu0 %v83
    %292 = vmatpush1.msra.mxu0 %v82
    %293 = vmatprep.subr.mxu0 %v79
    %294 = vmatpush1.msra.mxu0 %v78
    %295 = vmatprep.subr.mxu0 %v75
    %296 = vmatpush1.msra.mxu0 %v74
    %297 = vmatprep.subr.mxu0 %v71
    %298 = vmatpush1.msra.mxu0 %v70
    %299 = vmatprep.subr.mxu0 0.0
    %300 = vmatpush2.msra.mxu0 0.0
    %301 = vmatprep.subr.mxu0 0.0
    %302 = vmatpush2.msra.mxu0 0.0
    %303 = vmatprep.subr.mxu0 0.0
    %304 = vmatpush2.msra.mxu0 0.0
    %305 = vmatprep.subr.mxu0 0.0
    %306 = vmatpush2.msra.mxu0 0.0
    %307 = vmatprep.subr.mxu0 0.0
    %308 = vmatpush2.msra.mxu0 0.0
    %309 = vmatprep.subr.mxu0 0.0
    %310 = vmatpush2.msra.mxu0 0.0
    %311 = vmatprep.subr.mxu0 0.0
    %312 = vmatpush2.msra.mxu0 0.0
    %313 = vmatprep.subr.mxu0 0.0
    %314 = vmatpush2.msra.mxu0 0.0
    %315 = vmatprep.subr.mxu0 0.0
    %316 = vmatpush2.msra.mxu0 0.0
    %317 = vmatprep.subr.mxu0 0.0
    %318 = vmatpush2.msra.mxu0 0.0
    %319 = vmatprep.subr.mxu0 0.0
    %320 = vmatpush2.msra.mxu0 0.0
    %321 = vmatprep.subr.mxu0 0.0
    %322 = vmatpush2.msra.mxu0 0.0
    %323 = vmatprep.subr.mxu0 0.0
    %324 = vmatpush2.msra.mxu0 0.0
    %325 = vmatprep.subr.mxu0 0.0
    %326 = vmatpush2.msra.mxu0 0.0
    %327 = vmatprep.subr.mxu0 0.0
    %328 = vmatpush2.msra.mxu0 0.0
    %329 = vmatprep.subr.mxu0 0.0
    %330 = vmatpush2.msra.mxu0 0.0
    %331 = vmatprep.mubr.f32.mxu0 0.0
    %332 = vmatmul.mubr.f32.gmra.mxu0 %v60
    %v333 = vpop.f32.mrf.mxu0
    %v334 = vadd.f32 %v145, %v333
    %v335 = vpop.f32.mrf.mxu0
    %v336 = vadd.f32 %v149, %v335
    %337 = vmatprep.mubr.f32.mxu0 0.0
    %338 = vmatmul.mubr.f32.gmra.mxu0 %v61
    %v339 = vpop.f32.mrf.mxu0
    %v340 = vadd.f32 %v145, %v339
    %v341 = vpop.f32.mrf.mxu0
    %v342 = vadd.f32 %v149, %v341
    %343 = vmatprep.mubr.f32.mxu0 0.0
    %344 = vmatmul.mubr.f32.gmra.mxu0 %v62
    %v345 = vpop.f32.mrf.mxu0
    %v346 = vadd.f32 %v145, %v345
    %v347 = vpop.f32.mrf.mxu0
    %v348 = vadd.f32 %v149, %v347
    %349 = vmatprep.mubr.f32.mxu0 0.0
    %350 = vmatmul.mubr.f32.gmra.mxu0 %v63
    %v351 = vpop.f32.mrf.mxu0
    %v352 = vadd.f32 %v145, %v351
    %v353 = vpop.f32.mrf.mxu0
    %v354 = vadd.f32 %v149, %v353
    %355 = vmatprep.mubr.f32.mxu0 0.0
    %356 = vmatmul.mubr.f32.gmra.mxu0 %v64
    %v357 = vpop.f32.mrf.mxu0
    %v358 = vadd.f32 %v145, %v357
    %v359 = vpop.f32.mrf.mxu0
    %v360 = vadd.f32 %v149, %v359
    %361 = vmatprep.mubr.f32.mxu0 0.0
    %362 = vmatmul.mubr.f32.gmra.mxu0 %v65
    %v363 = vpop.f32.mrf.mxu0
    %v364 = vadd.f32 %v145, %v363
    %v365 = vpop.f32.mrf.mxu0
    %v366 = vadd.f32 %v149, %v365
    %367 = vmatprep.mubr.f32.mxu0 0.0
    %368 = vmatmul.mubr.f32.gmra.mxu0 %v66
    %v369 = vpop.f32.mrf.mxu0
    %v370 = vadd.f32 %v145, %v369
    %v371 = vpop.f32.mrf.mxu0
    %v372 = vadd.f32 %v149, %v371
    %373 = vmatprep.mubr.f32.mxu0 0.0
    %374 = vmatmul.mubr.f32.gmra.mxu0 %v67
    %v375 = vpop.f32.mrf.mxu0
    %v376 = vadd.f32 %v145, %v375
    %v377 = vpop.f32.mrf.mxu0
    %v378 = vadd.f32 %v149, %v377
    %379 = vdwg.mxu0
    %380 = vst [vmem:[#allocation2] sm:$0xff] %v221
    %381 = vst [vmem:[#allocation2 + $0x8] sm:$0xff] %v223
    %382 = vst [vmem:[#allocation2 + $0x10] sm:$0xff] %v334
    %383 = vst [vmem:[#allocation2 + $0x18] sm:$0xff] %v336
    %384 = vst [vmem:[#allocation2 + $0x20] sm:$0xff] %v227
    %385 = vst [vmem:[#allocation2 + $0x28] sm:$0xff] %v229
    %386 = vst [vmem:[#allocation2 + $0x30] sm:$0xff] %v340
    %387 = vst [vmem:[#allocation2 + $0x38] sm:$0xff] %v342
    %388 = vst [vmem:[#allocation2 + $0x40] sm:$0xff] %v233
    %389 = vst [vmem:[#allocation2 + $0x48] sm:$0xff] %v235
    %390 = vst [vmem:[#allocation2 + $0x50] sm:$0xff] %v346
    %391 = vst [vmem:[#allocation2 + $0x58] sm:$0xff] %v348
    %392 = vst [vmem:[#allocation2 + $0x60] sm:$0xff] %v239
    %393 = vst [vmem:[#allocation2 + $0x68] sm:$0xff] %v241
    %394 = vst [vmem:[#allocation2 + $0x70] sm:$0xff] %v352
    %395 = vst [vmem:[#allocation2 + $0x78] sm:$0xff] %v354
    %396 = vst [vmem:[#allocation2 + $0x80] sm:$0xff] %v245
    %397 = vst [vmem:[#allocation2 + $0x88] sm:$0xff] %v247
    %398 = vst [vmem:[#allocation2 + $0x90] sm:$0xff] %v358
    %399 = vst [vmem:[#allocation2 + $0x98] sm:$0xff] %v360
    %400 = vst [vmem:[#allocation2 + $0xa0] sm:$0xff] %v251
    %401 = vst [vmem:[#allocation2 + $0xa8] sm:$0xff] %v253
    %402 = vst [vmem:[#allocation2 + $0xb0] sm:$0xff] %v364
    %403 = vst [vmem:[#allocation2 + $0xb8] sm:$0xff] %v366
    %404 = vst [vmem:[#allocation2 + $0xc0] sm:$0xff] %v257
    %405 = vst [vmem:[#allocation2 + $0xc8] sm:$0xff] %v259
    %406 = vst [vmem:[#allocation2 + $0xd0] sm:$0xff] %v370
    %407 = vst [vmem:[#allocation2 + $0xd8] sm:$0xff] %v372
    %408 = vst [vmem:[#allocation2 + $0xe0] sm:$0xff] %v263
    %409 = vst [vmem:[#allocation2 + $0xe8] sm:$0xff] %v265
    %410 = vst [vmem:[#allocation2 + $0xf0] sm:$0xff] %v376
    %411 = vst [vmem:[#allocation2 + $0xf8] sm:$0xff] %v378
    %s412 = smul.u32 0, 4
    %s413 = smul.addr %s412, 8
    %s414 = scalar_lea.vmem [#allocation2], %s413
    %v415 = vld [vmem:[%s414] sm:$0xff]
    %v416 = vld [vmem:[#allocation8] sm:$0xf]
    %v417 = vld [vmem:[#allocation8 + $0x10] sm:$0xf]
    %v418 = vld [vmem:[#allocation8 + $0x20] sm:$0xf]
    %v419 = vld [vmem:[#allocation8 + $0x30] sm:$0xf]
    %v420 = vld [vmem:[#allocation8 + $0x40] sm:$0xf]
    %v421 = vld [vmem:[#allocation8 + $0x50] sm:$0xf]
    %v422 = vld [vmem:[#allocation8 + $0x60] sm:$0xf]
    %v423 = vld [vmem:[#allocation8 + $0x70] sm:$0xf]
    %v424 = vld [vmem:[#allocation8 + $0x80] sm:$0xf]
    %v425 = vld [vmem:[#allocation8 + $0x90] sm:$0xf]
    %v426 = vld [vmem:[#allocation8 + $0xa0] sm:$0xf]
    %v427 = vld [vmem:[#allocation8 + $0xb0] sm:$0xf]
    %v428 = vld [vmem:[#allocation8 + $0xc0] sm:$0xf]
    %v429 = vld [vmem:[#allocation8 + $0xd0] sm:$0xf]
    %v430 = vld [vmem:[#allocation8 + $0xe0] sm:$0xf]
    %v431 = vld [vmem:[#allocation8 + $0xf0] sm:$0xf]
    %v448 = vunpack.c.l.b16 %v416
    %v449 = vunpack.c.l.b16 %v417
    %v450 = vunpack.c.l.b16 %v418
    %v451 = vunpack.c.l.b16 %v419
    %v452 = vunpack.c.l.b16 %v420
    %v453 = vunpack.c.l.b16 %v421
    %v454 = vunpack.c.l.b16 %v422
    %v455 = vunpack.c.l.b16 %v423
    %v456 = vunpack.c.l.b16 %v424
    %v457 = vunpack.c.l.b16 %v425
    %v458 = vunpack.c.l.b16 %v426
    %v459 = vunpack.c.l.b16 %v427
    %v460 = vunpack.c.l.b16 %v428
    %v461 = vunpack.c.l.b16 %v429
    %v462 = vunpack.c.l.b16 %v430
    %v463 = vunpack.c.l.b16 %v431
    %v464 = vpack.c.b16 %v449, %v448
    %v465 = vpack.c.b16 %v451, %v450
    %v466 = vpack.c.b16 %v453, %v452
    %v467 = vpack.c.b16 %v455, %v454
    %v468 = vpack.c.b16 %v457, %v456
    %v469 = vpack.c.b16 %v459, %v458
    %v470 = vpack.c.b16 %v461, %v460
    %v471 = vpack.c.b16 %v463, %v462
    %480 = vmatprep.subr.bf16.mxu0 0
    %481 = vmatpush1.bf16.msra.mxu0 %v471
    %482 = vmatprep.subr.bf16.mxu0 0
    %483 = vmatpush1.bf16.msra.mxu0 %v470
    %484 = vmatprep.subr.bf16.mxu0 0
    %485 = vmatpush1.bf16.msra.mxu0 %v469
    %486 = vmatprep.subr.bf16.mxu0 0
    %487 = vmatpush1.bf16.msra.mxu0 %v468
    %488 = vmatprep.subr.bf16.mxu0 0
    %489 = vmatpush1.bf16.msra.mxu0 %v467
    %490 = vmatprep.subr.bf16.mxu0 0
    %491 = vmatpush1.bf16.msra.mxu0 %v466
    %492 = vmatprep.subr.bf16.mxu0 0
    %493 = vmatpush1.bf16.msra.mxu0 %v465
    %494 = vmatprep.subr.bf16.mxu0 0
    %495 = vmatpush1.bf16.msra.mxu0 %v464
    %496 = vmatprep.subr.bf16.mxu0 0
    %497 = vmatpush2.bf16.msra.mxu0 0
    %498 = vmatprep.subr.bf16.mxu0 0
    %499 = vmatpush2.bf16.msra.mxu0 0
    %500 = vmatprep.subr.bf16.mxu0 0
    %501 = vmatpush2.bf16.msra.mxu0 0
    %502 = vmatprep.subr.bf16.mxu0 0
    %503 = vmatpush2.bf16.msra.mxu0 0
    %504 = vmatprep.subr.bf16.mxu0 0
    %505 = vmatpush2.bf16.msra.mxu0 0
    %506 = vmatprep.subr.bf16.mxu0 0
    %507 = vmatpush2.bf16.msra.mxu0 0
    %508 = vmatprep.subr.bf16.mxu0 0
    %509 = vmatpush2.bf16.msra.mxu0 0
    %510 = vmatprep.subr.bf16.mxu0 0
    %511 = vmatpush2.bf16.msra.mxu0 0
    %512 = vmatprep.mubr.bf16.mxu0 0
    %513 = vmatmul.mubr.bf16.gmra.mxu0 0
    %v514 = vpop.f32.mrf.mxu0
    %v515 = vadd.f32 0.0, %v514
    %v516 = vpop.f32.mrf.mxu0
    %v517 = vpop.f32.mrf.mxu0
    %v518 = vpop.f32.mrf.mxu0
    %519 = vdwg.mxu0
    %v520 = vadd.f32 %v415, %v515
    %v521 = vmul.f32 %v520, 0.5
    %v522 = vtanh.pop %v521
    %v523 = vmul.f32 %v522, 0.5
    %v524 = vadd.f32 %v523, 0.5
    %v525 = vld [vmem:[%s414 + $0x8] sm:$0xff]
    %v526 = vld [vmem:[#allocation8 + $0x4] sm:$0xf]
    %v527 = vld [vmem:[#allocation8 + $0x14] sm:$0xf]
    %v528 = vld [vmem:[#allocation8 + $0x24] sm:$0xf]
    %v529 = vld [vmem:[#allocation8 + $0x34] sm:$0xf]
    %v530 = vld [vmem:[#allocation8 + $0x44] sm:$0xf]
    %v531 = vld [vmem:[#allocation8 + $0x54] sm:$0xf]
    %v532 = vld [vmem:[#allocation8 + $0x64] sm:$0xf]
    %v533 = vld [vmem:[#allocation8 + $0x74] sm:$0xf]
    %v534 = vld [vmem:[#allocation8 + $0x84] sm:$0xf]
    %v535 = vld [vmem:[#allocation8 + $0x94] sm:$0xf]
    %v536 = vld [vmem:[#allocation8 + $0xa4] sm:$0xf]
    %v537 = vld [vmem:[#allocation8 + $0xb4] sm:$0xf]
    %v538 = vld [vmem:[#allocation8 + $0xc4] sm:$0xf]
    %v539 = vld [vmem:[#allocation8 + $0xd4] sm:$0xf]
    %v540 = vld [vmem:[#allocation8 + $0xe4] sm:$0xf]
    %v541 = vld [vmem:[#allocation8 + $0xf4] sm:$0xf]
    %v558 = vunpack.c.l.b16 %v526
    %v559 = vunpack.c.l.b16 %v527
    %v560 = vunpack.c.l.b16 %v528
    %v561 = vunpack.c.l.b16 %v529
    %v562 = vunpack.c.l.b16 %v530
    %v563 = vunpack.c.l.b16 %v531
    %v564 = vunpack.c.l.b16 %v532
    %v565 = vunpack.c.l.b16 %v533
    %v566 = vunpack.c.l.b16 %v534
    %v567 = vunpack.c.l.b16 %v535
    %v568 = vunpack.c.l.b16 %v536
    %v569 = vunpack.c.l.b16 %v537
    %v570 = vunpack.c.l.b16 %v538
    %v571 = vunpack.c.l.b16 %v539
    %v572 = vunpack.c.l.b16 %v540
    %v573 = vunpack.c.l.b16 %v541
    %v574 = vpack.c.b16 %v559, %v558
    %v575 = vpack.c.b16 %v561, %v560
    %v576 = vpack.c.b16 %v563, %v562
    %v577 = vpack.c.b16 %v565, %v564
    %v578 = vpack.c.b16 %v567, %v566
    %v579 = vpack.c.b16 %v569, %v568
    %v580 = vpack.c.b16 %v571, %v570
    %v581 = vpack.c.b16 %v573, %v572
    %590 = vmatprep.subr.bf16.mxu0 0
    %591 = vmatpush1.bf16.msra.mxu0 %v581
    %592 = vmatprep.subr.bf16.mxu0 0
    %593 = vmatpush1.bf16.msra.mxu0 %v580
    %594 = vmatprep.subr.bf16.mxu0 0
    %595 = vmatpush1.bf16.msra.mxu0 %v579
    %596 = vmatprep.subr.bf16.mxu0 0
    %597 = vmatpush1.bf16.msra.mxu0 %v578
    %598 = vmatprep.subr.bf16.mxu0 0
    %599 = vmatpush1.bf16.msra.mxu0 %v577
    %600 = vmatprep.subr.bf16.mxu0 0
    %601 = vmatpush1.bf16.msra.mxu0 %v576
    %602 = vmatprep.subr.bf16.mxu0 0
    %603 = vmatpush1.bf16.msra.mxu0 %v575
    %604 = vmatprep.subr.bf16.mxu0 0
    %605 = vmatpush1.bf16.msra.mxu0 %v574
    %606 = vmatprep.subr.bf16.mxu0 0
    %607 = vmatpush2.bf16.msra.mxu0 0
    %608 = vmatprep.subr.bf16.mxu0 0
    %609 = vmatpush2.bf16.msra.mxu0 0
    %610 = vmatprep.subr.bf16.mxu0 0
    %611 = vmatpush2.bf16.msra.mxu0 0
    %612 = vmatprep.subr.bf16.mxu0 0
    %613 = vmatpush2.bf16.msra.mxu0 0
    %614 = vmatprep.subr.bf16.mxu0 0
    %615 = vmatpush2.bf16.msra.mxu0 0
    %616 = vmatprep.subr.bf16.mxu0 0
    %617 = vmatpush2.bf16.msra.mxu0 0
    %618 = vmatprep.subr.bf16.mxu0 0
    %619 = vmatpush2.bf16.msra.mxu0 0
    %620 = vmatprep.subr.bf16.mxu0 0
    %621 = vmatpush2.bf16.msra.mxu0 0
    %622 = vmatprep.mubr.bf16.mxu0 0
    %623 = vmatmul.mubr.bf16.gmra.mxu0 0
    %v624 = vpop.f32.mrf.mxu0
    %v625 = vadd.f32 0.0, %v624
    %v626 = vpop.f32.mrf.mxu0
    %v627 = vpop.f32.mrf.mxu0
    %v628 = vpop.f32.mrf.mxu0
    %629 = vdwg.mxu0
    %v630 = vadd.f32 %v525, %v625
    %v631 = vmul.f32 %v630, 0.5
    %v632 = vtanh.pop %v631
    %v633 = vmul.f32 %v632, 0.5
    %v634 = vadd.f32 %v633, 0.5
    %v635 = vld [vmem:[%s414 + $0x10] sm:$0xff]
    %v636 = vld [vmem:[#allocation8 + $0x8] sm:$0xf]
    %v637 = vld [vmem:[#allocation8 + $0x18] sm:$0xf]
    %v638 = vld [vmem:[#allocation8 + $0x28] sm:$0xf]
    %v639 = vld [vmem:[#allocation8 + $0x38] sm:$0xf]
    %v640 = vld [vmem:[#allocation8 + $0x48] sm:$0xf]
    %v641 = vld [vmem:[#allocation8 + $0x58] sm:$0xf]
    %v642 = vld [vmem:[#allocation8 + $0x68] sm:$0xf]
    %v643 = vld [vmem:[#allocation8 + $0x78] sm:$0xf]
    %v644 = vld [vmem:[#allocation8 + $0x88] sm:$0xf]
    %v645 = vld [vmem:[#allocation8 + $0x98] sm:$0xf]
    %v646 = vld [vmem:[#allocation8 + $0xa8] sm:$0xf]
    %v647 = vld [vmem:[#allocation8 + $0xb8] sm:$0xf]
    %v648 = vld [vmem:[#allocation8 + $0xc8] sm:$0xf]
    %v649 = vld [vmem:[#allocation8 + $0xd8] sm:$0xf]
    %v650 = vld [vmem:[#allocation8 + $0xe8] sm:$0xf]
    %v651 = vld [vmem:[#allocation8 + $0xf8] sm:$0xf]
    %v668 = vunpack.c.l.b16 %v636
    %v669 = vunpack.c.l.b16 %v637
    %v670 = vunpack.c.l.b16 %v638
    %v671 = vunpack.c.l.b16 %v639
    %v672 = vunpack.c.l.b16 %v640
    %v673 = vunpack.c.l.b16 %v641
    %v674 = vunpack.c.l.b16 %v642
    %v675 = vunpack.c.l.b16 %v643
    %v676 = vunpack.c.l.b16 %v644
    %v677 = vunpack.c.l.b16 %v645
    %v678 = vunpack.c.l.b16 %v646
    %v679 = vunpack.c.l.b16 %v647
    %v680 = vunpack.c.l.b16 %v648
    %v681 = vunpack.c.l.b16 %v649
    %v682 = vunpack.c.l.b16 %v650
    %v683 = vunpack.c.l.b16 %v651
    %v684 = vpack.c.b16 %v669, %v668
    %v685 = vpack.c.b16 %v671, %v670
    %v686 = vpack.c.b16 %v673, %v672
    %v687 = vpack.c.b16 %v675, %v674
    %v688 = vpack.c.b16 %v677, %v676
    %v689 = vpack.c.b16 %v679, %v678
    %v690 = vpack.c.b16 %v681, %v680
    %v691 = vpack.c.b16 %v683, %v682
    %700 = vmatprep.subr.bf16.mxu0 0
    %701 = vmatpush1.bf16.msra.mxu0 %v691
    %702 = vmatprep.subr.bf16.mxu0 0
    %703 = vmatpush1.bf16.msra.mxu0 %v690
    %704 = vmatprep.subr.bf16.mxu0 0
    %705 = vmatpush1.bf16.msra.mxu0 %v689
    %706 = vmatprep.subr.bf16.mxu0 0
    %707 = vmatpush1.bf16.msra.mxu0 %v688
    %708 = vmatprep.subr.bf16.mxu0 0
    %709 = vmatpush1.bf16.msra.mxu0 %v687
    %710 = vmatprep.subr.bf16.mxu0 0
    %711 = vmatpush1.bf16.msra.mxu0 %v686
    %712 = vmatprep.subr.bf16.mxu0 0
    %713 = vmatpush1.bf16.msra.mxu0 %v685
    %714 = vmatprep.subr.bf16.mxu0 0
    %715 = vmatpush1.bf16.msra.mxu0 %v684
    %716 = vmatprep.subr.bf16.mxu0 0
    %717 = vmatpush2.bf16.msra.mxu0 0
    %718 = vmatprep.subr.bf16.mxu0 0
    %719 = vmatpush2.bf16.msra.mxu0 0
    %720 = vmatprep.subr.bf16.mxu0 0
    %721 = vmatpush2.bf16.msra.mxu0 0
    %722 = vmatprep.subr.bf16.mxu0 0
    %723 = vmatpush2.bf16.msra.mxu0 0
    %724 = vmatprep.subr.bf16.mxu0 0
    %725 = vmatpush2.bf16.msra.mxu0 0
    %726 = vmatprep.subr.bf16.mxu0 0
    %727 = vmatpush2.bf16.msra.mxu0 0
    %728 = vmatprep.subr.bf16.mxu0 0
    %729 = vmatpush2.bf16.msra.mxu0 0
    %730 = vmatprep.subr.bf16.mxu0 0
    %731 = vmatpush2.bf16.msra.mxu0 0
    %732 = vmatprep.mubr.bf16.mxu0 0
    %733 = vmatmul.mubr.bf16.gmra.mxu0 0
    %v734 = vpop.f32.mrf.mxu0
    %v735 = vadd.f32 0.0, %v734
    %v736 = vpop.f32.mrf.mxu0
    %v737 = vpop.f32.mrf.mxu0
    %v738 = vpop.f32.mrf.mxu0
    %739 = vdwg.mxu0
    %v740 = vadd.f32 %v635, %v735
    %v741 = vtanh.pop %v740
    %v742 = vmul.f32 %v634, 0.0
    %v743 = vmul.f32 %v524, %v741
    %v744 = vadd.f32 %v742, %v743
    %v745 = vld [vmem:[%s414 + $0x18] sm:$0xff]
    %v746 = vld [vmem:[#allocation8 + $0xc] sm:$0xf]
    %v747 = vld [vmem:[#allocation8 + $0x1c] sm:$0xf]
    %v748 = vld [vmem:[#allocation8 + $0x2c] sm:$0xf]
    %v749 = vld [vmem:[#allocation8 + $0x3c] sm:$0xf]
    %v750 = vld [vmem:[#allocation8 + $0x4c] sm:$0xf]
    %v751 = vld [vmem:[#allocation8 + $0x5c] sm:$0xf]
    %v752 = vld [vmem:[#allocation8 + $0x6c] sm:$0xf]
    %v753 = vld [vmem:[#allocation8 + $0x7c] sm:$0xf]
    %v754 = vld [vmem:[#allocation8 + $0x8c] sm:$0xf]
    %v755 = vld [vmem:[#allocation8 + $0x9c] sm:$0xf]
    %v756 = vld [vmem:[#allocation8 + $0xac] sm:$0xf]
    %v757 = vld [vmem:[#allocation8 + $0xbc] sm:$0xf]
    %v758 = vld [vmem:[#allocation8 + $0xcc] sm:$0xf]
    %v759 = vld [vmem:[#allocation8 + $0xdc] sm:$0xf]
    %v760 = vld [vmem:[#allocation8 + $0xec] sm:$0xf]
    %v761 = vld [vmem:[#allocation8 + $0xfc] sm:$0xf]
    %v778 = vunpack.c.l.b16 %v746
    %v779 = vunpack.c.l.b16 %v747
    %v780 = vunpack.c.l.b16 %v748
    %v781 = vunpack.c.l.b16 %v749
    %v782 = vunpack.c.l.b16 %v750
    %v783 = vunpack.c.l.b16 %v751
    %v784 = vunpack.c.l.b16 %v752
    %v785 = vunpack.c.l.b16 %v753
    %v786 = vunpack.c.l.b16 %v754
    %v787 = vunpack.c.l.b16 %v755
    %v788 = vunpack.c.l.b16 %v756
    %v789 = vunpack.c.l.b16 %v757
    %v790 = vunpack.c.l.b16 %v758
    %v791 = vunpack.c.l.b16 %v759
    %v792 = vunpack.c.l.b16 %v760
    %v793 = vunpack.c.l.b16 %v761
    %v794 = vpack.c.b16 %v779, %v778
    %v795 = vpack.c.b16 %v781, %v780
    %v796 = vpack.c.b16 %v783, %v782
    %v797 = vpack.c.b16 %v785, %v784
    %v798 = vpack.c.b16 %v787, %v786
    %v799 = vpack.c.b16 %v789, %v788
    %v800 = vpack.c.b16 %v791, %v790
    %v801 = vpack.c.b16 %v793, %v792
    %810 = vmatprep.subr.bf16.mxu0 0
    %811 = vmatpush1.bf16.msra.mxu0 %v801
    %812 = vmatprep.subr.bf16.mxu0 0
    %813 = vmatpush1.bf16.msra.mxu0 %v800
    %814 = vmatprep.subr.bf16.mxu0 0
    %815 = vmatpush1.bf16.msra.mxu0 %v799
    %816 = vmatprep.subr.bf16.mxu0 0
    %817 = vmatpush1.bf16.msra.mxu0 %v798
    %818 = vmatprep.subr.bf16.mxu0 0
    %819 = vmatpush1.bf16.msra.mxu0 %v797
    %820 = vmatprep.subr.bf16.mxu0 0
    %821 = vmatpush1.bf16.msra.mxu0 %v796
    %822 = vmatprep.subr.bf16.mxu0 0
    %823 = vmatpush1.bf16.msra.mxu0 %v795
    %824 = vmatprep.subr.bf16.mxu0 0
    %825 = vmatpush1.bf16.msra.mxu0 %v794
    %826 = vmatprep.subr.bf16.mxu0 0
    %827 = vmatpush2.bf16.msra.mxu0 0
    %828 = vmatprep.subr.bf16.mxu0 0
    %829 = vmatpush2.bf16.msra.mxu0 0
    %830 = vmatprep.subr.bf16.mxu0 0
    %831 = vmatpush2.bf16.msra.mxu0 0
    %832 = vmatprep.subr.bf16.mxu0 0
    %833 = vmatpush2.bf16.msra.mxu0 0
    %834 = vmatprep.subr.bf16.mxu0 0
    %835 = vmatpush2.bf16.msra.mxu0 0
    %836 = vmatprep.subr.bf16.mxu0 0
    %837 = vmatpush2.bf16.msra.mxu0 0
    %838 = vmatprep.subr.bf16.mxu0 0
    %839 = vmatpush2.bf16.msra.mxu0 0
    %840 = vmatprep.subr.bf16.mxu0 0
    %841 = vmatpush2.bf16.msra.mxu0 0
    %842 = vmatprep.mubr.bf16.mxu0 0
    %843 = vmatmul.mubr.bf16.gmra.mxu0 0
    %v844 = vpop.f32.mrf.mxu0
    %v845 = vadd.f32 0.0, %v844
    %v846 = vpop.f32.mrf.mxu0
    %v847 = vpop.f32.mrf.mxu0
    %v848 = vpop.f32.mrf.mxu0
    %849 = vdwg.mxu0
    %v850 = vadd.f32 %v745, %v845
    %v851 = vmul.f32 %v850, 0.5
    %v852 = vtanh.pop %v851
    %v853 = vmul.f32 %v852, 0.5
    %v854 = vadd.f32 %v853, 0.5
    %v855 = vtanh.pop %v744
    %v856 = vmul.f32 %v854, %v855
    %v857 = vpack.c.bf16 %v856, %v856
    %s858 = smul.u32 1, 4
    %s859 = smul.addr %s858, 8
    %s860 = scalar_lea.vmem [#allocation2], %s859
    %v861 = vld [vmem:[%s860] sm:$0xff]
    %862 = vmatprep.subr.bf16.mxu0 0
    %863 = vmatpush1.bf16.msra.mxu0 %v471
    %864 = vmatprep.subr.bf16.mxu0 0
    %865 = vmatpush1.bf16.msra.mxu0 %v470
    %866 = vmatprep.subr.bf16.mxu0 0
    %867 = vmatpush1.bf16.msra.mxu0 %v469
    %868 = vmatprep.subr.bf16.mxu0 0
    %869 = vmatpush1.bf16.msra.mxu0 %v468
    %870 = vmatprep.subr.bf16.mxu0 0
    %871 = vmatpush1.bf16.msra.mxu0 %v467
    %872 = vmatprep.subr.bf16.mxu0 0
    %873 = vmatpush1.bf16.msra.mxu0 %v466
    %874 = vmatprep.subr.bf16.mxu0 0
    %875 = vmatpush1.bf16.msra.mxu0 %v465
    %876 = vmatprep.subr.bf16.mxu0 0
    %877 = vmatpush1.bf16.msra.mxu0 %v464
    %878 = vmatprep.subr.bf16.mxu0 0
    %879 = vmatpush2.bf16.msra.mxu0 0
    %880 = vmatprep.subr.bf16.mxu0 0
    %881 = vmatpush2.bf16.msra.mxu0 0
    %882 = vmatprep.subr.bf16.mxu0 0
    %883 = vmatpush2.bf16.msra.mxu0 0
    %884 = vmatprep.subr.bf16.mxu0 0
    %885 = vmatpush2.bf16.msra.mxu0 0
    %886 = vmatprep.subr.bf16.mxu0 0
    %887 = vmatpush2.bf16.msra.mxu0 0
    %888 = vmatprep.subr.bf16.mxu0 0
    %889 = vmatpush2.bf16.msra.mxu0 0
    %890 = vmatprep.subr.bf16.mxu0 0
    %891 = vmatpush2.bf16.msra.mxu0 0
    %892 = vmatprep.subr.bf16.mxu0 0
    %893 = vmatpush2.bf16.msra.mxu0 0
    %894 = vmatprep.mubr.bf16.mxu0 0
    %895 = vmatmul.mubr.bf16.gmra.mxu0 %v857
    %v896 = vpop.f32.mrf.mxu0
    %v897 = vadd.f32 0.0, %v896
    %v898 = vpop.f32.mrf.mxu0
    %v899 = vpop.f32.mrf.mxu0
    %v900 = vpop.f32.mrf.mxu0
    %901 = vdwg.mxu0
    %v902 = vadd.f32 %v861, %v897
    %v903 = vmul.f32 %v902, 0.5
    %v904 = vtanh.pop %v903
    %v905 = vmul.f32 %v904, 0.5
    %v906 = vadd.f32 %v905, 0.5
    %v907 = vld [vmem:[%s860 + $0x8] sm:$0xff]
    %908 = vmatprep.subr.bf16.mxu0 0
    %909 = vmatpush1.bf16.msra.mxu0 %v581
    %910 = vmatprep.subr.bf16.mxu0 0
    %911 = vmatpush1.bf16.msra.mxu0 %v580
    %912 = vmatprep.subr.bf16.mxu0 0
    %913 = vmatpush1.bf16.msra.mxu0 %v579
    %914 = vmatprep.subr.bf16.mxu0 0
    %915 = vmatpush1.bf16.msra.mxu0 %v578
    %916 = vmatprep.subr.bf16.mxu0 0
    %917 = vmatpush1.bf16.msra.mxu0 %v577
    %918 = vmatprep.subr.bf16.mxu0 0
    %919 = vmatpush1.bf16.msra.mxu0 %v576
    %920 = vmatprep.subr.bf16.mxu0 0
    %921 = vmatpush1.bf16.msra.mxu0 %v575
    %922 = vmatprep.subr.bf16.mxu0 0
    %923 = vmatpush1.bf16.msra.mxu0 %v574
    %924 = vmatprep.subr.bf16.mxu0 0
    %925 = vmatpush2.bf16.msra.mxu0 0
    %926 = vmatprep.subr.bf16.mxu0 0
    %927 = vmatpush2.bf16.msra.mxu0 0
    %928 = vmatprep.subr.bf16.mxu0 0
    %929 = vmatpush2.bf16.msra.mxu0 0
    %930 = vmatprep.subr.bf16.mxu0 0
    %931 = vmatpush2.bf16.msra.mxu0 0
    %932 = vmatprep.subr.bf16.mxu0 0
    %933 = vmatpush2.bf16.msra.mxu0 0
    %934 = vmatprep.subr.bf16.mxu0 0
    %935 = vmatpush2.bf16.msra.mxu0 0
    %936 = vmatprep.subr.bf16.mxu0 0
    %937 = vmatpush2.bf16.msra.mxu0 0
    %938 = vmatprep.subr.bf16.mxu0 0
    %939 = vmatpush2.bf16.msra.mxu0 0
    %940 = vmatprep.mubr.bf16.mxu0 0
    %941 = vmatmul.mubr.bf16.gmra.mxu0 %v857
    %v942 = vpop.f32.mrf.mxu0
    %v943 = vadd.f32 0.0, %v942
    %v944 = vpop.f32.mrf.mxu0
    %v945 = vpop.f32.mrf.mxu0
    %v946 = vpop.f32.mrf.mxu0
    %947 = vdwg.mxu0
    %v948 = vadd.f32 %v907, %v943
    %v949 = vmul.f32 %v948, 0.5
    %v950 = vtanh.pop %v949
    %v951 = vmul.f32 %v950, 0.5
    %v952 = vadd.f32 %v951, 0.5
    %v953 = vld [vmem:[%s860 + $0x10] sm:$0xff]
    %954 = vmatprep.subr.bf16.mxu0 0
    %955 = vmatpush1.bf16.msra.mxu0 %v691
    %956 = vmatprep.subr.bf16.mxu0 0
    %957 = vmatpush1.bf16.msra.mxu0 %v690
    %958 = vmatprep.subr.bf16.mxu0 0
    %959 = vmatpush1.bf16.msra.mxu0 %v689
    %960 = vmatprep.subr.bf16.mxu0 0
    %961 = vmatpush1.bf16.msra.mxu0 %v688
    %962 = vmatprep.subr.bf16.mxu0 0
    %963 = vmatpush1.bf16.msra.mxu0 %v687
    %964 = vmatprep.subr.bf16.mxu0 0
    %965 = vmatpush1.bf16.msra.mxu0 %v686
    %966 = vmatprep.subr.bf16.mxu0 0
    %967 = vmatpush1.bf16.msra.mxu0 %v685
    %968 = vmatprep.subr.bf16.mxu0 0
    %969 = vmatpush1.bf16.msra.mxu0 %v684
    %970 = vmatprep.subr.bf16.mxu0 0
    %971 = vmatpush2.bf16.msra.mxu0 0
    %972 = vmatprep.subr.bf16.mxu0 0
    %973 = vmatpush2.bf16.msra.mxu0 0
    %974 = vmatprep.subr.bf16.mxu0 0
    %975 = vmatpush2.bf16.msra.mxu0 0
    %976 = vmatprep.subr.bf16.mxu0 0
    %977 = vmatpush2.bf16.msra.mxu0 0
    %978 = vmatprep.subr.bf16.mxu0 0
    %979 = vmatpush2.bf16.msra.mxu0 0
    %980 = vmatprep.subr.bf16.mxu0 0
    %981 = vmatpush2.bf16.msra.mxu0 0
    %982 = vmatprep.subr.bf16.mxu0 0
    %983 = vmatpush2.bf16.msra.mxu0 0
    %984 = vmatprep.subr.bf16.mxu0 0
    %985 = vmatpush2.bf16.msra.mxu0 0
    %986 = vmatprep.mubr.bf16.mxu0 0
    %987 = vmatmul.mubr.bf16.gmra.mxu0 %v857
    %v988 = vpop.f32.mrf.mxu0
    %v989 = vadd.f32 0.0, %v988
    %v990 = vpop.f32.mrf.mxu0
    %v991 = vpop.f32.mrf.mxu0
    %v992 = vpop.f32.mrf.mxu0
    %993 = vdwg.mxu0
    %v994 = vadd.f32 %v953, %v989
    %v995 = vtanh.pop %v994
    %v996 = vmul.f32 %v952, %v744
    %v997 = vmul.f32 %v906, %v995
    %v998 = vadd.f32 %v996, %v997
    %v999 = vld [vmem:[%s860 + $0x18] sm:$0xff]
    %1000 = vmatprep.subr.bf16.mxu0 0
    %1001 = vmatpush1.bf16.msra.mxu0 %v801
    %1002 = vmatprep.subr.bf16.mxu0 0
    %1003 = vmatpush1.bf16.msra.mxu0 %v800
    %1004 = vmatprep.subr.bf16.mxu0 0
    %1005 = vmatpush1.bf16.msra.mxu0 %v799
    %1006 = vmatprep.subr.bf16.mxu0 0
    %1007 = vmatpush1.bf16.msra.mxu0 %v798
    %1008 = vmatprep.subr.bf16.mxu0 0
    %1009 = vmatpush1.bf16.msra.mxu0 %v797
    %1010 = vmatprep.subr.bf16.mxu0 0
    %1011 = vmatpush1.bf16.msra.mxu0 %v796
    %1012 = vmatprep.subr.bf16.mxu0 0
    %1013 = vmatpush1.bf16.msra.mxu0 %v795
    %1014 = vmatprep.subr.bf16.mxu0 0
    %1015 = vmatpush1.bf16.msra.mxu0 %v794
    %1016 = vmatprep.subr.bf16.mxu0 0
    %1017 = vmatpush2.bf16.msra.mxu0 0
    %1018 = vmatprep.subr.bf16.mxu0 0
    %1019 = vmatpush2.bf16.msra.mxu0 0
    %1020 = vmatprep.subr.bf16.mxu0 0
    %1021 = vmatpush2.bf16.msra.mxu0 0
    %1022 = vmatprep.subr.bf16.mxu0 0
    %1023 = vmatpush2.bf16.msra.mxu0 0
    %1024 = vmatprep.subr.bf16.mxu0 0
    %1025 = vmatpush2.bf16.msra.mxu0 0
    %1026 = vmatprep.subr.bf16.mxu0 0
    %1027 = vmatpush2.bf16.msra.mxu0 0
    %1028 = vmatprep.subr.bf16.mxu0 0
    %1029 = vmatpush2.bf16.msra.mxu0 0
    %1030 = vmatprep.subr.bf16.mxu0 0
    %1031 = vmatpush2.bf16.msra.mxu0 0
    %1032 = vmatprep.mubr.bf16.mxu0 0
    %1033 = vmatmul.mubr.bf16.gmra.mxu0 %v857
    %v1034 = vpop.f32.mrf.mxu0
    %v1035 = vadd.f32 0.0, %v1034
    %v1036 = vpop.f32.mrf.mxu0
    %v1037 = vpop.f32.mrf.mxu0
    %v1038 = vpop.f32.mrf.mxu0
    %1039 = vdwg.mxu0
    %v1040 = vadd.f32 %v999, %v1035
    %v1041 = vmul.f32 %v1040, 0.5
    %v1042 = vtanh.pop %v1041
    %v1043 = vmul.f32 %v1042, 0.5
    %v1044 = vadd.f32 %v1043, 0.5
    %v1045 = vtanh.pop %v998
    %v1046 = vmul.f32 %v1044, %v1045
    %v1047 = vpack.c.bf16 %v1046, %v1046
    %s1048 = smul.u32 2, 4
    %s1049 = smul.addr %s1048, 8
    %s1050 = scalar_lea.vmem [#allocation2], %s1049
    %v1051 = vld [vmem:[%s1050] sm:$0xff]
    %1052 = vmatprep.subr.bf16.mxu0 0
    %1053 = vmatpush1.bf16.msra.mxu0 %v471
    %1054 = vmatprep.subr.bf16.mxu0 0
    %1055 = vmatpush1.bf16.msra.mxu0 %v470
    %1056 = vmatprep.subr.bf16.mxu0 0
    %1057 = vmatpush1.bf16.msra.mxu0 %v469
    %1058 = vmatprep.subr.bf16.mxu0 0
    %1059 = vmatpush1.bf16.msra.mxu0 %v468
    %1060 = vmatprep.subr.bf16.mxu0 0
    %1061 = vmatpush1.bf16.msra.mxu0 %v467
    %1062 = vmatprep.subr.bf16.mxu0 0
    %1063 = vmatpush1.bf16.msra.mxu0 %v466
    %1064 = vmatprep.subr.bf16.mxu0 0
    %1065 = vmatpush1.bf16.msra.mxu0 %v465
    %1066 = vmatprep.subr.bf16.mxu0 0
    %1067 = vmatpush1.bf16.msra.mxu0 %v464
    %1068 = vmatprep.subr.bf16.mxu0 0
    %1069 = vmatpush2.bf16.msra.mxu0 0
    %1070 = vmatprep.subr.bf16.mxu0 0
    %1071 = vmatpush2.bf16.msra.mxu0 0
    %1072 = vmatprep.subr.bf16.mxu0 0
    %1073 = vmatpush2.bf16.msra.mxu0 0
    %1074 = vmatprep.subr.bf16.mxu0 0
    %1075 = vmatpush2.bf16.msra.mxu0 0
    %1076 = vmatprep.subr.bf16.mxu0 0
    %1077 = vmatpush2.bf16.msra.mxu0 0
    %1078 = vmatprep.subr.bf16.mxu0 0
    %1079 = vmatpush2.bf16.msra.mxu0 0
    %1080 = vmatprep.subr.bf16.mxu0 0
    %1081 = vmatpush2.bf16.msra.mxu0 0
    %1082 = vmatprep.subr.bf16.mxu0 0
    %1083 = vmatpush2.bf16.msra.mxu0 0
    %1084 = vmatprep.mubr.bf16.mxu0 0
    %1085 = vmatmul.mubr.bf16.gmra.mxu0 %v1047
    %v1086 = vpop.f32.mrf.mxu0
    %v1087 = vadd.f32 0.0, %v1086
    %v1088 = vpop.f32.mrf.mxu0
    %v1089 = vpop.f32.mrf.mxu0
    %v1090 = vpop.f32.mrf.mxu0
    %1091 = vdwg.mxu0
    %v1092 = vadd.f32 %v1051, %v1087
    %v1093 = vmul.f32 %v1092, 0.5
    %v1094 = vtanh.pop %v1093
    %v1095 = vmul.f32 %v1094, 0.5
    %v1096 = vadd.f32 %v1095, 0.5
    %v1097 = vld [vmem:[%s1050 + $0x8] sm:$0xff]
    %1098 = vmatprep.subr.bf16.mxu0 0
    %1099 = vmatpush1.bf16.msra.mxu0 %v581
    %1100 = vmatprep.subr.bf16.mxu0 0
    %1101 = vmatpush1.bf16.msra.mxu0 %v580
    %1102 = vmatprep.subr.bf16.mxu0 0
    %1103 = vmatpush1.bf16.msra.mxu0 %v579
    %1104 = vmatprep.subr.bf16.mxu0 0
    %1105 = vmatpush1.bf16.msra.mxu0 %v578
    %1106 = vmatprep.subr.bf16.mxu0 0
    %1107 = vmatpush1.bf16.msra.mxu0 %v577
    %1108 = vmatprep.subr.bf16.mxu0 0
    %1109 = vmatpush1.bf16.msra.mxu0 %v576
    %1110 = vmatprep.subr.bf16.mxu0 0
    %1111 = vmatpush1.bf16.msra.mxu0 %v575
    %1112 = vmatprep.subr.bf16.mxu0 0
    %1113 = vmatpush1.bf16.msra.mxu0 %v574
    %1114 = vmatprep.subr.bf16.mxu0 0
    %1115 = vmatpush2.bf16.msra.mxu0 0
    %1116 = vmatprep.subr.bf16.mxu0 0
    %1117 = vmatpush2.bf16.msra.mxu0 0
    %1118 = vmatprep.subr.bf16.mxu0 0
    %1119 = vmatpush2.bf16.msra.mxu0 0
    %1120 = vmatprep.subr.bf16.mxu0 0
    %1121 = vmatpush2.bf16.msra.mxu0 0
    %1122 = vmatprep.subr.bf16.mxu0 0
    %1123 = vmatpush2.bf16.msra.mxu0 0
    %1124 = vmatprep.subr.bf16.mxu0 0
    %1125 = vmatpush2.bf16.msra.mxu0 0
    %1126 = vmatprep.subr.bf16.mxu0 0
    %1127 = vmatpush2.bf16.msra.mxu0 0
    %1128 = vmatprep.subr.bf16.mxu0 0
    %1129 = vmatpush2.bf16.msra.mxu0 0
    %1130 = vmatprep.mubr.bf16.mxu0 0
    %1131 = vmatmul.mubr.bf16.gmra.mxu0 %v1047
    %v1132 = vpop.f32.mrf.mxu0
    %v1133 = vadd.f32 0.0, %v1132
    %v1134 = vpop.f32.mrf.mxu0
    %v1135 = vpop.f32.mrf.mxu0
    %v1136 = vpop.f32.mrf.mxu0
    %1137 = vdwg.mxu0
    %v1138 = vadd.f32 %v1097, %v1133
    %v1139 = vmul.f32 %v1138, 0.5
    %v1140 = vtanh.pop %v1139
    %v1141 = vmul.f32 %v1140, 0.5
    %v1142 = vadd.f32 %v1141, 0.5
    %v1143 = vld [vmem:[%s1050 + $0x10] sm:$0xff]
    %1144 = vmatprep.subr.bf16.mxu0 0
    %1145 = vmatpush1.bf16.msra.mxu0 %v691
    %1146 = vmatprep.subr.bf16.mxu0 0
    %1147 = vmatpush1.bf16.msra.mxu0 %v690
    %1148 = vmatprep.subr.bf16.mxu0 0
    %1149 = vmatpush1.bf16.msra.mxu0 %v689
    %1150 = vmatprep.subr.bf16.mxu0 0
    %1151 = vmatpush1.bf16.msra.mxu0 %v688
    %1152 = vmatprep.subr.bf16.mxu0 0
    %1153 = vmatpush1.bf16.msra.mxu0 %v687
    %1154 = vmatprep.subr.bf16.mxu0 0
    %1155 = vmatpush1.bf16.msra.mxu0 %v686
    %1156 = vmatprep.subr.bf16.mxu0 0
    %1157 = vmatpush1.bf16.msra.mxu0 %v685
    %1158 = vmatprep.subr.bf16.mxu0 0
    %1159 = vmatpush1.bf16.msra.mxu0 %v684
    %1160 = vmatprep.subr.bf16.mxu0 0
    %1161 = vmatpush2.bf16.msra.mxu0 0
    %1162 = vmatprep.subr.bf16.mxu0 0
    %1163 = vmatpush2.bf16.msra.mxu0 0
    %1164 = vmatprep.subr.bf16.mxu0 0
    %1165 = vmatpush2.bf16.msra.mxu0 0
    %1166 = vmatprep.subr.bf16.mxu0 0
    %1167 = vmatpush2.bf16.msra.mxu0 0
    %1168 = vmatprep.subr.bf16.mxu0 0
    %1169 = vmatpush2.bf16.msra.mxu0 0
    %1170 = vmatprep.subr.bf16.mxu0 0
    %1171 = vmatpush2.bf16.msra.mxu0 0
    %1172 = vmatprep.subr.bf16.mxu0 0
    %1173 = vmatpush2.bf16.msra.mxu0 0
    %1174 = vmatprep.subr.bf16.mxu0 0
    %1175 = vmatpush2.bf16.msra.mxu0 0
    %1176 = vmatprep.mubr.bf16.mxu0 0
    %1177 = vmatmul.mubr.bf16.gmra.mxu0 %v1047
    %v1178 = vpop.f32.mrf.mxu0
    %v1179 = vadd.f32 0.0, %v1178
    %v1180 = vpop.f32.mrf.mxu0
    %v1181 = vpop.f32.mrf.mxu0
    %v1182 = vpop.f32.mrf.mxu0
    %1183 = vdwg.mxu0
    %v1184 = vadd.f32 %v1143, %v1179
    %v1185 = vtanh.pop %v1184
    %v1186 = vmul.f32 %v1142, %v998
    %v1187 = vmul.f32 %v1096, %v1185
    %v1188 = vadd.f32 %v1186, %v1187
    %v1189 = vld [vmem:[%s1050 + $0x18] sm:$0xff]
    %1190 = vmatprep.subr.bf16.mxu0 0
    %1191 = vmatpush1.bf16.msra.mxu0 %v801
    %1192 = vmatprep.subr.bf16.mxu0 0
    %1193 = vmatpush1.bf16.msra.mxu0 %v800
    %1194 = vmatprep.subr.bf16.mxu0 0
    %1195 = vmatpush1.bf16.msra.mxu0 %v799
    %1196 = vmatprep.subr.bf16.mxu0 0
    %1197 = vmatpush1.bf16.msra.mxu0 %v798
    %1198 = vmatprep.subr.bf16.mxu0 0
    %1199 = vmatpush1.bf16.msra.mxu0 %v797
    %1200 = vmatprep.subr.bf16.mxu0 0
    %1201 = vmatpush1.bf16.msra.mxu0 %v796
    %1202 = vmatprep.subr.bf16.mxu0 0
    %1203 = vmatpush1.bf16.msra.mxu0 %v795
    %1204 = vmatprep.subr.bf16.mxu0 0
    %1205 = vmatpush1.bf16.msra.mxu0 %v794
    %1206 = vmatprep.subr.bf16.mxu0 0
    %1207 = vmatpush2.bf16.msra.mxu0 0
    %1208 = vmatprep.subr.bf16.mxu0 0
    %1209 = vmatpush2.bf16.msra.mxu0 0
    %1210 = vmatprep.subr.bf16.mxu0 0
    %1211 = vmatpush2.bf16.msra.mxu0 0
    %1212 = vmatprep.subr.bf16.mxu0 0
    %1213 = vmatpush2.bf16.msra.mxu0 0
    %1214 = vmatprep.subr.bf16.mxu0 0
    %1215 = vmatpush2.bf16.msra.mxu0 0
    %1216 = vmatprep.subr.bf16.mxu0 0
    %1217 = vmatpush2.bf16.msra.mxu0 0
    %1218 = vmatprep.subr.bf16.mxu0 0
    %1219 = vmatpush2.bf16.msra.mxu0 0
    %1220 = vmatprep.subr.bf16.mxu0 0
    %1221 = vmatpush2.bf16.msra.mxu0 0
    %1222 = vmatprep.mubr.bf16.mxu0 0
    %1223 = vmatmul.mubr.bf16.gmra.mxu0 %v1047
    %v1224 = vpop.f32.mrf.mxu0
    %v1225 = vadd.f32 0.0, %v1224
    %v1226 = vpop.f32.mrf.mxu0
    %v1227 = vpop.f32.mrf.mxu0
    %v1228 = vpop.f32.mrf.mxu0
    %1229 = vdwg.mxu0
    %v1230 = vadd.f32 %v1189, %v1225
    %v1231 = vmul.f32 %v1230, 0.5
    %v1232 = vtanh.pop %v1231
    %v1233 = vmul.f32 %v1232, 0.5
    %v1234 = vadd.f32 %v1233, 0.5
    %v1235 = vtanh.pop %v1188
    %v1236 = vmul.f32 %v1234, %v1235
    %v1237 = vpack.c.bf16 %v1236, %v1236
    %s1238 = smul.u32 3, 4
    %s1239 = smul.addr %s1238, 8
    %s1240 = scalar_lea.vmem [#allocation2], %s1239
    %v1241 = vld [vmem:[%s1240] sm:$0xff]
    %1242 = vmatprep.subr.bf16.mxu0 0
    %1243 = vmatpush1.bf16.msra.mxu0 %v471
    %1244 = vmatprep.subr.bf16.mxu0 0
    %1245 = vmatpush1.bf16.msra.mxu0 %v470
    %1246 = vmatprep.subr.bf16.mxu0 0
    %1247 = vmatpush1.bf16.msra.mxu0 %v469
    %1248 = vmatprep.subr.bf16.mxu0 0
    %1249 = vmatpush1.bf16.msra.mxu0 %v468
    %1250 = vmatprep.subr.bf16.mxu0 0
    %1251 = vmatpush1.bf16.msra.mxu0 %v467
    %1252 = vmatprep.subr.bf16.mxu0 0
    %1253 = vmatpush1.bf16.msra.mxu0 %v466
    %1254 = vmatprep.subr.bf16.mxu0 0
    %1255 = vmatpush1.bf16.msra.mxu0 %v465
    %1256 = vmatprep.subr.bf16.mxu0 0
    %1257 = vmatpush1.bf16.msra.mxu0 %v464
    %1258 = vmatprep.subr.bf16.mxu0 0
    %1259 = vmatpush2.bf16.msra.mxu0 0
    %1260 = vmatprep.subr.bf16.mxu0 0
    %1261 = vmatpush2.bf16.msra.mxu0 0
    %1262 = vmatprep.subr.bf16.mxu0 0
    %1263 = vmatpush2.bf16.msra.mxu0 0
    %1264 = vmatprep.subr.bf16.mxu0 0
    %1265 = vmatpush2.bf16.msra.mxu0 0
    %1266 = vmatprep.subr.bf16.mxu0 0
    %1267 = vmatpush2.bf16.msra.mxu0 0
    %1268 = vmatprep.subr.bf16.mxu0 0
    %1269 = vmatpush2.bf16.msra.mxu0 0
    %1270 = vmatprep.subr.bf16.mxu0 0
    %1271 = vmatpush2.bf16.msra.mxu0 0
    %1272 = vmatprep.subr.bf16.mxu0 0
    %1273 = vmatpush2.bf16.msra.mxu0 0
    %1274 = vmatprep.mubr.bf16.mxu0 0
    %1275 = vmatmul.mubr.bf16.gmra.mxu0 %v1237
    %v1276 = vpop.f32.mrf.mxu0
    %v1277 = vadd.f32 0.0, %v1276
    %v1278 = vpop.f32.mrf.mxu0
    %v1279 = vpop.f32.mrf.mxu0
    %v1280 = vpop.f32.mrf.mxu0
    %1281 = vdwg.mxu0
    %v1282 = vadd.f32 %v1241, %v1277
    %v1283 = vmul.f32 %v1282, 0.5
    %v1284 = vtanh.pop %v1283
    %v1285 = vmul.f32 %v1284, 0.5
    %v1286 = vadd.f32 %v1285, 0.5
    %v1287 = vld [vmem:[%s1240 + $0x8] sm:$0xff]
    %1288 = vmatprep.subr.bf16.mxu0 0
    %1289 = vmatpush1.bf16.msra.mxu0 %v581
    %1290 = vmatprep.subr.bf16.mxu0 0
    %1291 = vmatpush1.bf16.msra.mxu0 %v580
    %1292 = vmatprep.subr.bf16.mxu0 0
    %1293 = vmatpush1.bf16.msra.mxu0 %v579
    %1294 = vmatprep.subr.bf16.mxu0 0
    %1295 = vmatpush1.bf16.msra.mxu0 %v578
    %1296 = vmatprep.subr.bf16.mxu0 0
    %1297 = vmatpush1.bf16.msra.mxu0 %v577
    %1298 = vmatprep.subr.bf16.mxu0 0
    %1299 = vmatpush1.bf16.msra.mxu0 %v576
    %1300 = vmatprep.subr.bf16.mxu0 0
    %1301 = vmatpush1.bf16.msra.mxu0 %v575
    %1302 = vmatprep.subr.bf16.mxu0 0
    %1303 = vmatpush1.bf16.msra.mxu0 %v574
    %1304 = vmatprep.subr.bf16.mxu0 0
    %1305 = vmatpush2.bf16.msra.mxu0 0
    %1306 = vmatprep.subr.bf16.mxu0 0
    %1307 = vmatpush2.bf16.msra.mxu0 0
    %1308 = vmatprep.subr.bf16.mxu0 0
    %1309 = vmatpush2.bf16.msra.mxu0 0
    %1310 = vmatprep.subr.bf16.mxu0 0
    %1311 = vmatpush2.bf16.msra.mxu0 0
    %1312 = vmatprep.subr.bf16.mxu0 0
    %1313 = vmatpush2.bf16.msra.mxu0 0
    %1314 = vmatprep.subr.bf16.mxu0 0
    %1315 = vmatpush2.bf16.msra.mxu0 0
    %1316 = vmatprep.subr.bf16.mxu0 0
    %1317 = vmatpush2.bf16.msra.mxu0 0
    %1318 = vmatprep.subr.bf16.mxu0 0
    %1319 = vmatpush2.bf16.msra.mxu0 0
    %1320 = vmatprep.mubr.bf16.mxu0 0
    %1321 = vmatmul.mubr.bf16.gmra.mxu0 %v1237
    %v1322 = vpop.f32.mrf.mxu0
    %v1323 = vadd.f32 0.0, %v1322
    %v1324 = vpop.f32.mrf.mxu0
    %v1325 = vpop.f32.mrf.mxu0
    %v1326 = vpop.f32.mrf.mxu0
    %1327 = vdwg.mxu0
    %v1328 = vadd.f32 %v1287, %v1323
    %v1329 = vmul.f32 %v1328, 0.5
    %v1330 = vtanh.pop %v1329
    %v1331 = vmul.f32 %v1330, 0.5
    %v1332 = vadd.f32 %v1331, 0.5
    %v1333 = vld [vmem:[%s1240 + $0x10] sm:$0xff]
    %1334 = vmatprep.subr.bf16.mxu0 0
    %1335 = vmatpush1.bf16.msra.mxu0 %v691
    %1336 = vmatprep.subr.bf16.mxu0 0
    %1337 = vmatpush1.bf16.msra.mxu0 %v690
    %1338 = vmatprep.subr.bf16.mxu0 0
    %1339 = vmatpush1.bf16.msra.mxu0 %v689
    %1340 = vmatprep.subr.bf16.mxu0 0
    %1341 = vmatpush1.bf16.msra.mxu0 %v688
    %1342 = vmatprep.subr.bf16.mxu0 0
    %1343 = vmatpush1.bf16.msra.mxu0 %v687
    %1344 = vmatprep.subr.bf16.mxu0 0
    %1345 = vmatpush1.bf16.msra.mxu0 %v686
    %1346 = vmatprep.subr.bf16.mxu0 0
    %1347 = vmatpush1.bf16.msra.mxu0 %v685
    %1348 = vmatprep.subr.bf16.mxu0 0
    %1349 = vmatpush1.bf16.msra.mxu0 %v684
    %1350 = vmatprep.subr.bf16.mxu0 0
    %1351 = vmatpush2.bf16.msra.mxu0 0
    %1352 = vmatprep.subr.bf16.mxu0 0
    %1353 = vmatpush2.bf16.msra.mxu0 0
    %1354 = vmatprep.subr.bf16.mxu0 0
    %1355 = vmatpush2.bf16.msra.mxu0 0
    %1356 = vmatprep.subr.bf16.mxu0 0
    %1357 = vmatpush2.bf16.msra.mxu0 0
    %1358 = vmatprep.subr.bf16.mxu0 0
    %1359 = vmatpush2.bf16.msra.mxu0 0
    %1360 = vmatprep.subr.bf16.mxu0 0
    %1361 = vmatpush2.bf16.msra.mxu0 0
    %1362 = vmatprep.subr.bf16.mxu0 0
    %1363 = vmatpush2.bf16.msra.mxu0 0
    %1364 = vmatprep.subr.bf16.mxu0 0
    %1365 = vmatpush2.bf16.msra.mxu0 0
    %1366 = vmatprep.mubr.bf16.mxu0 0
    %1367 = vmatmul.mubr.bf16.gmra.mxu0 %v1237
    %v1368 = vpop.f32.mrf.mxu0
    %v1369 = vadd.f32 0.0, %v1368
    %v1370 = vpop.f32.mrf.mxu0
    %v1371 = vpop.f32.mrf.mxu0
    %v1372 = vpop.f32.mrf.mxu0
    %1373 = vdwg.mxu0
    %v1374 = vadd.f32 %v1333, %v1369
    %v1375 = vtanh.pop %v1374
    %v1376 = vmul.f32 %v1332, %v1188
    %v1377 = vmul.f32 %v1286, %v1375
    %v1378 = vadd.f32 %v1376, %v1377
    %v1379 = vld [vmem:[%s1240 + $0x18] sm:$0xff]
    %1380 = vmatprep.subr.bf16.mxu0 0
    %1381 = vmatpush1.bf16.msra.mxu0 %v801
    %1382 = vmatprep.subr.bf16.mxu0 0
    %1383 = vmatpush1.bf16.msra.mxu0 %v800
    %1384 = vmatprep.subr.bf16.mxu0 0
    %1385 = vmatpush1.bf16.msra.mxu0 %v799
    %1386 = vmatprep.subr.bf16.mxu0 0
    %1387 = vmatpush1.bf16.msra.mxu0 %v798
    %1388 = vmatprep.subr.bf16.mxu0 0
    %1389 = vmatpush1.bf16.msra.mxu0 %v797
    %1390 = vmatprep.subr.bf16.mxu0 0
    %1391 = vmatpush1.bf16.msra.mxu0 %v796
    %1392 = vmatprep.subr.bf16.mxu0 0
    %1393 = vmatpush1.bf16.msra.mxu0 %v795
    %1394 = vmatprep.subr.bf16.mxu0 0
    %1395 = vmatpush1.bf16.msra.mxu0 %v794
    %1396 = vmatprep.subr.bf16.mxu0 0
    %1397 = vmatpush2.bf16.msra.mxu0 0
    %1398 = vmatprep.subr.bf16.mxu0 0
    %1399 = vmatpush2.bf16.msra.mxu0 0
    %1400 = vmatprep.subr.bf16.mxu0 0
    %1401 = vmatpush2.bf16.msra.mxu0 0
    %1402 = vmatprep.subr.bf16.mxu0 0
    %1403 = vmatpush2.bf16.msra.mxu0 0
    %1404 = vmatprep.subr.bf16.mxu0 0
    %1405 = vmatpush2.bf16.msra.mxu0 0
    %1406 = vmatprep.subr.bf16.mxu0 0
    %1407 = vmatpush2.bf16.msra.mxu0 0
    %1408 = vmatprep.subr.bf16.mxu0 0
    %1409 = vmatpush2.bf16.msra.mxu0 0
    %1410 = vmatprep.subr.bf16.mxu0 0
    %1411 = vmatpush2.bf16.msra.mxu0 0
    %1412 = vmatprep.mubr.bf16.mxu0 0
    %1413 = vmatmul.mubr.bf16.gmra.mxu0 %v1237
    %v1414 = vpop.f32.mrf.mxu0
    %v1415 = vadd.f32 0.0, %v1414
    %v1416 = vpop.f32.mrf.mxu0
    %v1417 = vpop.f32.mrf.mxu0
    %v1418 = vpop.f32.mrf.mxu0
    %1419 = vdwg.mxu0
    %v1420 = vadd.f32 %v1379, %v1415
    %v1421 = vmul.f32 %v1420, 0.5
    %v1422 = vtanh.pop %v1421
    %v1423 = vmul.f32 %v1422, 0.5
    %v1424 = vadd.f32 %v1423, 0.5
    %v1425 = vtanh.pop %v1378
    %v1426 = vmul.f32 %v1424, %v1425
    %v1427 = vpack.c.bf16 %v1426, %v1426
    %s1428 = smul.u32 4, 4
    %s1429 = smul.addr %s1428, 8
    %s1430 = scalar_lea.vmem [#allocation2], %s1429
    %v1431 = vld [vmem:[%s1430] sm:$0xff]
    %1432 = vmatprep.subr.bf16.mxu0 0
    %1433 = vmatpush1.bf16.msra.mxu0 %v471
    %1434 = vmatprep.subr.bf16.mxu0 0
    %1435 = vmatpush1.bf16.msra.mxu0 %v470
    %1436 = vmatprep.subr.bf16.mxu0 0
    %1437 = vmatpush1.bf16.msra.mxu0 %v469
    %1438 = vmatprep.subr.bf16.mxu0 0
    %1439 = vmatpush1.bf16.msra.mxu0 %v468
    %1440 = vmatprep.subr.bf16.mxu0 0
    %1441 = vmatpush1.bf16.msra.mxu0 %v467
    %1442 = vmatprep.subr.bf16.mxu0 0
    %1443 = vmatpush1.bf16.msra.mxu0 %v466
    %1444 = vmatprep.subr.bf16.mxu0 0
    %1445 = vmatpush1.bf16.msra.mxu0 %v465
    %1446 = vmatprep.subr.bf16.mxu0 0
    %1447 = vmatpush1.bf16.msra.mxu0 %v464
    %1448 = vmatprep.subr.bf16.mxu0 0
    %1449 = vmatpush2.bf16.msra.mxu0 0
    %1450 = vmatprep.subr.bf16.mxu0 0
    %1451 = vmatpush2.bf16.msra.mxu0 0
    %1452 = vmatprep.subr.bf16.mxu0 0
    %1453 = vmatpush2.bf16.msra.mxu0 0
    %1454 = vmatprep.subr.bf16.mxu0 0
    %1455 = vmatpush2.bf16.msra.mxu0 0
    %1456 = vmatprep.subr.bf16.mxu0 0
    %1457 = vmatpush2.bf16.msra.mxu0 0
    %1458 = vmatprep.subr.bf16.mxu0 0
    %1459 = vmatpush2.bf16.msra.mxu0 0
    %1460 = vmatprep.subr.bf16.mxu0 0
    %1461 = vmatpush2.bf16.msra.mxu0 0
    %1462 = vmatprep.subr.bf16.mxu0 0
    %1463 = vmatpush2.bf16.msra.mxu0 0
    %1464 = vmatprep.mubr.bf16.mxu0 0
    %1465 = vmatmul.mubr.bf16.gmra.mxu0 %v1427
    %v1466 = vpop.f32.mrf.mxu0
    %v1467 = vadd.f32 0.0, %v1466
    %v1468 = vpop.f32.mrf.mxu0
    %v1469 = vpop.f32.mrf.mxu0
    %v1470 = vpop.f32.mrf.mxu0
    %1471 = vdwg.mxu0
    %v1472 = vadd.f32 %v1431, %v1467
    %v1473 = vmul.f32 %v1472, 0.5
    %v1474 = vtanh.pop %v1473
    %v1475 = vmul.f32 %v1474, 0.5
    %v1476 = vadd.f32 %v1475, 0.5
    %v1477 = vld [vmem:[%s1430 + $0x8] sm:$0xff]
    %1478 = vmatprep.subr.bf16.mxu0 0
    %1479 = vmatpush1.bf16.msra.mxu0 %v581
    %1480 = vmatprep.subr.bf16.mxu0 0
    %1481 = vmatpush1.bf16.msra.mxu0 %v580
    %1482 = vmatprep.subr.bf16.mxu0 0
    %1483 = vmatpush1.bf16.msra.mxu0 %v579
    %1484 = vmatprep.subr.bf16.mxu0 0
    %1485 = vmatpush1.bf16.msra.mxu0 %v578
    %1486 = vmatprep.subr.bf16.mxu0 0
    %1487 = vmatpush1.bf16.msra.mxu0 %v577
    %1488 = vmatprep.subr.bf16.mxu0 0
    %1489 = vmatpush1.bf16.msra.mxu0 %v576
    %1490 = vmatprep.subr.bf16.mxu0 0
    %1491 = vmatpush1.bf16.msra.mxu0 %v575
    %1492 = vmatprep.subr.bf16.mxu0 0
    %1493 = vmatpush1.bf16.msra.mxu0 %v574
    %1494 = vmatprep.subr.bf16.mxu0 0
    %1495 = vmatpush2.bf16.msra.mxu0 0
    %1496 = vmatprep.subr.bf16.mxu0 0
    %1497 = vmatpush2.bf16.msra.mxu0 0
    %1498 = vmatprep.subr.bf16.mxu0 0
    %1499 = vmatpush2.bf16.msra.mxu0 0
    %1500 = vmatprep.subr.bf16.mxu0 0
    %1501 = vmatpush2.bf16.msra.mxu0 0
    %1502 = vmatprep.subr.bf16.mxu0 0
    %1503 = vmatpush2.bf16.msra.mxu0 0
    %1504 = vmatprep.subr.bf16.mxu0 0
    %1505 = vmatpush2.bf16.msra.mxu0 0
    %1506 = vmatprep.subr.bf16.mxu0 0
    %1507 = vmatpush2.bf16.msra.mxu0 0
    %1508 = vmatprep.subr.bf16.mxu0 0
    %1509 = vmatpush2.bf16.msra.mxu0 0
    %1510 = vmatprep.mubr.bf16.mxu0 0
    %1511 = vmatmul.mubr.bf16.gmra.mxu0 %v1427
    %v1512 = vpop.f32.mrf.mxu0
    %v1513 = vadd.f32 0.0, %v1512
    %v1514 = vpop.f32.mrf.mxu0
    %v1515 = vpop.f32.mrf.mxu0
    %v1516 = vpop.f32.mrf.mxu0
    %1517 = vdwg.mxu0
    %v1518 = vadd.f32 %v1477, %v1513
    %v1519 = vmul.f32 %v1518, 0.5
    %v1520 = vtanh.pop %v1519
    %v1521 = vmul.f32 %v1520, 0.5
    %v1522 = vadd.f32 %v1521, 0.5
    %v1523 = vld [vmem:[%s1430 + $0x10] sm:$0xff]
    %1524 = vmatprep.subr.bf16.mxu0 0
    %1525 = vmatpush1.bf16.msra.mxu0 %v691
    %1526 = vmatprep.subr.bf16.mxu0 0
    %1527 = vmatpush1.bf16.msra.mxu0 %v690
    %1528 = vmatprep.subr.bf16.mxu0 0
    %1529 = vmatpush1.bf16.msra.mxu0 %v689
    %1530 = vmatprep.subr.bf16.mxu0 0
    %1531 = vmatpush1.bf16.msra.mxu0 %v688
    %1532 = vmatprep.subr.bf16.mxu0 0
    %1533 = vmatpush1.bf16.msra.mxu0 %v687
    %1534 = vmatprep.subr.bf16.mxu0 0
    %1535 = vmatpush1.bf16.msra.mxu0 %v686
    %1536 = vmatprep.subr.bf16.mxu0 0
    %1537 = vmatpush1.bf16.msra.mxu0 %v685
    %1538 = vmatprep.subr.bf16.mxu0 0
    %1539 = vmatpush1.bf16.msra.mxu0 %v684
    %1540 = vmatprep.subr.bf16.mxu0 0
    %1541 = vmatpush2.bf16.msra.mxu0 0
    %1542 = vmatprep.subr.bf16.mxu0 0
    %1543 = vmatpush2.bf16.msra.mxu0 0
    %1544 = vmatprep.subr.bf16.mxu0 0
    %1545 = vmatpush2.bf16.msra.mxu0 0
    %1546 = vmatprep.subr.bf16.mxu0 0
    %1547 = vmatpush2.bf16.msra.mxu0 0
    %1548 = vmatprep.subr.bf16.mxu0 0
    %1549 = vmatpush2.bf16.msra.mxu0 0
    %1550 = vmatprep.subr.bf16.mxu0 0
    %1551 = vmatpush2.bf16.msra.mxu0 0
    %1552 = vmatprep.subr.bf16.mxu0 0
    %1553 = vmatpush2.bf16.msra.mxu0 0
    %1554 = vmatprep.subr.bf16.mxu0 0
    %1555 = vmatpush2.bf16.msra.mxu0 0
    %1556 = vmatprep.mubr.bf16.mxu0 0
    %1557 = vmatmul.mubr.bf16.gmra.mxu0 %v1427
    %v1558 = vpop.f32.mrf.mxu0
    %v1559 = vadd.f32 0.0, %v1558
    %v1560 = vpop.f32.mrf.mxu0
    %v1561 = vpop.f32.mrf.mxu0
    %v1562 = vpop.f32.mrf.mxu0
    %1563 = vdwg.mxu0
    %v1564 = vadd.f32 %v1523, %v1559
    %v1565 = vtanh.pop %v1564
    %v1566 = vmul.f32 %v1522, %v1378
    %v1567 = vmul.f32 %v1476, %v1565
    %v1568 = vadd.f32 %v1566, %v1567
    %v1569 = vld [vmem:[%s1430 + $0x18] sm:$0xff]
    %1570 = vmatprep.subr.bf16.mxu0 0
    %1571 = vmatpush1.bf16.msra.mxu0 %v801
    %1572 = vmatprep.subr.bf16.mxu0 0
    %1573 = vmatpush1.bf16.msra.mxu0 %v800
    %1574 = vmatprep.subr.bf16.mxu0 0
    %1575 = vmatpush1.bf16.msra.mxu0 %v799
    %1576 = vmatprep.subr.bf16.mxu0 0
    %1577 = vmatpush1.bf16.msra.mxu0 %v798
    %1578 = vmatprep.subr.bf16.mxu0 0
    %1579 = vmatpush1.bf16.msra.mxu0 %v797
    %1580 = vmatprep.subr.bf16.mxu0 0
    %1581 = vmatpush1.bf16.msra.mxu0 %v796
    %1582 = vmatprep.subr.bf16.mxu0 0
    %1583 = vmatpush1.bf16.msra.mxu0 %v795
    %1584 = vmatprep.subr.bf16.mxu0 0
    %1585 = vmatpush1.bf16.msra.mxu0 %v794
    %1586 = vmatprep.subr.bf16.mxu0 0
    %1587 = vmatpush2.bf16.msra.mxu0 0
    %1588 = vmatprep.subr.bf16.mxu0 0
    %1589 = vmatpush2.bf16.msra.mxu0 0
    %1590 = vmatprep.subr.bf16.mxu0 0
    %1591 = vmatpush2.bf16.msra.mxu0 0
    %1592 = vmatprep.subr.bf16.mxu0 0
    %1593 = vmatpush2.bf16.msra.mxu0 0
    %1594 = vmatprep.subr.bf16.mxu0 0
    %1595 = vmatpush2.bf16.msra.mxu0 0
    %1596 = vmatprep.subr.bf16.mxu0 0
    %1597 = vmatpush2.bf16.msra.mxu0 0
    %1598 = vmatprep.subr.bf16.mxu0 0
    %1599 = vmatpush2.bf16.msra.mxu0 0
    %1600 = vmatprep.subr.bf16.mxu0 0
    %1601 = vmatpush2.bf16.msra.mxu0 0
    %1602 = vmatprep.mubr.bf16.mxu0 0
    %1603 = vmatmul.mubr.bf16.gmra.mxu0 %v1427
    %v1604 = vpop.f32.mrf.mxu0
    %v1605 = vadd.f32 0.0, %v1604
    %v1606 = vpop.f32.mrf.mxu0
    %v1607 = vpop.f32.mrf.mxu0
    %v1608 = vpop.f32.mrf.mxu0
    %1609 = vdwg.mxu0
    %v1610 = vadd.f32 %v1569, %v1605
    %v1611 = vmul.f32 %v1610, 0.5
    %v1612 = vtanh.pop %v1611
    %v1613 = vmul.f32 %v1612, 0.5
    %v1614 = vadd.f32 %v1613, 0.5
    %v1615 = vtanh.pop %v1568
    %v1616 = vmul.f32 %v1614, %v1615
    %v1617 = vpack.c.bf16 %v1616, %v1616
    %s1618 = smul.u32 5, 4
    %s1619 = smul.addr %s1618, 8
    %s1620 = scalar_lea.vmem [#allocation2], %s1619
    %v1621 = vld [vmem:[%s1620] sm:$0xff]
    %1622 = vmatprep.subr.bf16.mxu0 0
    %1623 = vmatpush1.bf16.msra.mxu0 %v471
    %1624 = vmatprep.subr.bf16.mxu0 0
    %1625 = vmatpush1.bf16.msra.mxu0 %v470
    %1626 = vmatprep.subr.bf16.mxu0 0
    %1627 = vmatpush1.bf16.msra.mxu0 %v469
    %1628 = vmatprep.subr.bf16.mxu0 0
    %1629 = vmatpush1.bf16.msra.mxu0 %v468
    %1630 = vmatprep.subr.bf16.mxu0 0
    %1631 = vmatpush1.bf16.msra.mxu0 %v467
    %1632 = vmatprep.subr.bf16.mxu0 0
    %1633 = vmatpush1.bf16.msra.mxu0 %v466
    %1634 = vmatprep.subr.bf16.mxu0 0
    %1635 = vmatpush1.bf16.msra.mxu0 %v465
    %1636 = vmatprep.subr.bf16.mxu0 0
    %1637 = vmatpush1.bf16.msra.mxu0 %v464
    %1638 = vmatprep.subr.bf16.mxu0 0
    %1639 = vmatpush2.bf16.msra.mxu0 0
    %1640 = vmatprep.subr.bf16.mxu0 0
    %1641 = vmatpush2.bf16.msra.mxu0 0
    %1642 = vmatprep.subr.bf16.mxu0 0
    %1643 = vmatpush2.bf16.msra.mxu0 0
    %1644 = vmatprep.subr.bf16.mxu0 0
    %1645 = vmatpush2.bf16.msra.mxu0 0
    %1646 = vmatprep.subr.bf16.mxu0 0
    %1647 = vmatpush2.bf16.msra.mxu0 0
    %1648 = vmatprep.subr.bf16.mxu0 0
    %1649 = vmatpush2.bf16.msra.mxu0 0
    %1650 = vmatprep.subr.bf16.mxu0 0
    %1651 = vmatpush2.bf16.msra.mxu0 0
    %1652 = vmatprep.subr.bf16.mxu0 0
    %1653 = vmatpush2.bf16.msra.mxu0 0
    %1654 = vmatprep.mubr.bf16.mxu0 0
    %1655 = vmatmul.mubr.bf16.gmra.mxu0 %v1617
    %v1656 = vpop.f32.mrf.mxu0
    %v1657 = vadd.f32 0.0, %v1656
    %v1658 = vpop.f32.mrf.mxu0
    %v1659 = vpop.f32.mrf.mxu0
    %v1660 = vpop.f32.mrf.mxu0
    %1661 = vdwg.mxu0
    %v1662 = vadd.f32 %v1621, %v1657
    %v1663 = vmul.f32 %v1662, 0.5
    %v1664 = vtanh.pop %v1663
    %v1665 = vmul.f32 %v1664, 0.5
    %v1666 = vadd.f32 %v1665, 0.5
    %v1667 = vld [vmem:[%s1620 + $0x8] sm:$0xff]
    %1668 = vmatprep.subr.bf16.mxu0 0
    %1669 = vmatpush1.bf16.msra.mxu0 %v581
    %1670 = vmatprep.subr.bf16.mxu0 0
    %1671 = vmatpush1.bf16.msra.mxu0 %v580
    %1672 = vmatprep.subr.bf16.mxu0 0
    %1673 = vmatpush1.bf16.msra.mxu0 %v579
    %1674 = vmatprep.subr.bf16.mxu0 0
    %1675 = vmatpush1.bf16.msra.mxu0 %v578
    %1676 = vmatprep.subr.bf16.mxu0 0
    %1677 = vmatpush1.bf16.msra.mxu0 %v577
    %1678 = vmatprep.subr.bf16.mxu0 0
    %1679 = vmatpush1.bf16.msra.mxu0 %v576
    %1680 = vmatprep.subr.bf16.mxu0 0
    %1681 = vmatpush1.bf16.msra.mxu0 %v575
    %1682 = vmatprep.subr.bf16.mxu0 0
    %1683 = vmatpush1.bf16.msra.mxu0 %v574
    %1684 = vmatprep.subr.bf16.mxu0 0
    %1685 = vmatpush2.bf16.msra.mxu0 0
    %1686 = vmatprep.subr.bf16.mxu0 0
    %1687 = vmatpush2.bf16.msra.mxu0 0
    %1688 = vmatprep.subr.bf16.mxu0 0
    %1689 = vmatpush2.bf16.msra.mxu0 0
    %1690 = vmatprep.subr.bf16.mxu0 0
    %1691 = vmatpush2.bf16.msra.mxu0 0
    %1692 = vmatprep.subr.bf16.mxu0 0
    %1693 = vmatpush2.bf16.msra.mxu0 0
    %1694 = vmatprep.subr.bf16.mxu0 0
    %1695 = vmatpush2.bf16.msra.mxu0 0
    %1696 = vmatprep.subr.bf16.mxu0 0
    %1697 = vmatpush2.bf16.msra.mxu0 0
    %1698 = vmatprep.subr.bf16.mxu0 0
    %1699 = vmatpush2.bf16.msra.mxu0 0
    %1700 = vmatprep.mubr.bf16.mxu0 0
    %1701 = vmatmul.mubr.bf16.gmra.mxu0 %v1617
    %v1702 = vpop.f32.mrf.mxu0
    %v1703 = vadd.f32 0.0, %v1702
    %v1704 = vpop.f32.mrf.mxu0
    %v1705 = vpop.f32.mrf.mxu0
    %v1706 = vpop.f32.mrf.mxu0
    %1707 = vdwg.mxu0
    %v1708 = vadd.f32 %v1667, %v1703
    %v1709 = vmul.f32 %v1708, 0.5
    %v1710 = vtanh.pop %v1709
    %v1711 = vmul.f32 %v1710, 0.5
    %v1712 = vadd.f32 %v1711, 0.5
    %v1713 = vld [vmem:[%s1620 + $0x10] sm:$0xff]
    %1714 = vmatprep.subr.bf16.mxu0 0
    %1715 = vmatpush1.bf16.msra.mxu0 %v691
    %1716 = vmatprep.subr.bf16.mxu0 0
    %1717 = vmatpush1.bf16.msra.mxu0 %v690
    %1718 = vmatprep.subr.bf16.mxu0 0
    %1719 = vmatpush1.bf16.msra.mxu0 %v689
    %1720 = vmatprep.subr.bf16.mxu0 0
    %1721 = vmatpush1.bf16.msra.mxu0 %v688
    %1722 = vmatprep.subr.bf16.mxu0 0
    %1723 = vmatpush1.bf16.msra.mxu0 %v687
    %1724 = vmatprep.subr.bf16.mxu0 0
    %1725 = vmatpush1.bf16.msra.mxu0 %v686
    %1726 = vmatprep.subr.bf16.mxu0 0
    %1727 = vmatpush1.bf16.msra.mxu0 %v685
    %1728 = vmatprep.subr.bf16.mxu0 0
    %1729 = vmatpush1.bf16.msra.mxu0 %v684
    %1730 = vmatprep.subr.bf16.mxu0 0
    %1731 = vmatpush2.bf16.msra.mxu0 0
    %1732 = vmatprep.subr.bf16.mxu0 0
    %1733 = vmatpush2.bf16.msra.mxu0 0
    %1734 = vmatprep.subr.bf16.mxu0 0
    %1735 = vmatpush2.bf16.msra.mxu0 0
    %1736 = vmatprep.subr.bf16.mxu0 0
    %1737 = vmatpush2.bf16.msra.mxu0 0
    %1738 = vmatprep.subr.bf16.mxu0 0
    %1739 = vmatpush2.bf16.msra.mxu0 0
    %1740 = vmatprep.subr.bf16.mxu0 0
    %1741 = vmatpush2.bf16.msra.mxu0 0
    %1742 = vmatprep.subr.bf16.mxu0 0
    %1743 = vmatpush2.bf16.msra.mxu0 0
    %1744 = vmatprep.subr.bf16.mxu0 0
    %1745 = vmatpush2.bf16.msra.mxu0 0
    %1746 = vmatprep.mubr.bf16.mxu0 0
    %1747 = vmatmul.mubr.bf16.gmra.mxu0 %v1617
    %v1748 = vpop.f32.mrf.mxu0
    %v1749 = vadd.f32 0.0, %v1748
    %v1750 = vpop.f32.mrf.mxu0
    %v1751 = vpop.f32.mrf.mxu0
    %v1752 = vpop.f32.mrf.mxu0
    %1753 = vdwg.mxu0
    %v1754 = vadd.f32 %v1713, %v1749
    %v1755 = vtanh.pop %v1754
    %v1756 = vmul.f32 %v1712, %v1568
    %v1757 = vmul.f32 %v1666, %v1755
    %v1758 = vadd.f32 %v1756, %v1757
    %v1759 = vld [vmem:[%s1620 + $0x18] sm:$0xff]
    %1760 = vmatprep.subr.bf16.mxu0 0
    %1761 = vmatpush1.bf16.msra.mxu0 %v801
    %1762 = vmatprep.subr.bf16.mxu0 0
    %1763 = vmatpush1.bf16.msra.mxu0 %v800
    %1764 = vmatprep.subr.bf16.mxu0 0
    %1765 = vmatpush1.bf16.msra.mxu0 %v799
    %1766 = vmatprep.subr.bf16.mxu0 0
    %1767 = vmatpush1.bf16.msra.mxu0 %v798
    %1768 = vmatprep.subr.bf16.mxu0 0
    %1769 = vmatpush1.bf16.msra.mxu0 %v797
    %1770 = vmatprep.subr.bf16.mxu0 0
    %1771 = vmatpush1.bf16.msra.mxu0 %v796
    %1772 = vmatprep.subr.bf16.mxu0 0
    %1773 = vmatpush1.bf16.msra.mxu0 %v795
    %1774 = vmatprep.subr.bf16.mxu0 0
    %1775 = vmatpush1.bf16.msra.mxu0 %v794
    %1776 = vmatprep.subr.bf16.mxu0 0
    %1777 = vmatpush2.bf16.msra.mxu0 0
    %1778 = vmatprep.subr.bf16.mxu0 0
    %1779 = vmatpush2.bf16.msra.mxu0 0
    %1780 = vmatprep.subr.bf16.mxu0 0
    %1781 = vmatpush2.bf16.msra.mxu0 0
    %1782 = vmatprep.subr.bf16.mxu0 0
    %1783 = vmatpush2.bf16.msra.mxu0 0
    %1784 = vmatprep.subr.bf16.mxu0 0
    %1785 = vmatpush2.bf16.msra.mxu0 0
    %1786 = vmatprep.subr.bf16.mxu0 0
    %1787 = vmatpush2.bf16.msra.mxu0 0
    %1788 = vmatprep.subr.bf16.mxu0 0
    %1789 = vmatpush2.bf16.msra.mxu0 0
    %1790 = vmatprep.subr.bf16.mxu0 0
    %1791 = vmatpush2.bf16.msra.mxu0 0
    %1792 = vmatprep.mubr.bf16.mxu0 0
    %1793 = vmatmul.mubr.bf16.gmra.mxu0 %v1617
    %v1794 = vpop.f32.mrf.mxu0
    %v1795 = vadd.f32 0.0, %v1794
    %v1796 = vpop.f32.mrf.mxu0
    %v1797 = vpop.f32.mrf.mxu0
    %v1798 = vpop.f32.mrf.mxu0
    %1799 = vdwg.mxu0
    %v1800 = vadd.f32 %v1759, %v1795
    %v1801 = vmul.f32 %v1800, 0.5
    %v1802 = vtanh.pop %v1801
    %v1803 = vmul.f32 %v1802, 0.5
    %v1804 = vadd.f32 %v1803, 0.5
    %v1805 = vtanh.pop %v1758
    %v1806 = vmul.f32 %v1804, %v1805
    %v1807 = vpack.c.bf16 %v1806, %v1806
    %s1808 = smul.u32 6, 4
    %s1809 = smul.addr %s1808, 8
    %s1810 = scalar_lea.vmem [#allocation2], %s1809
    %v1811 = vld [vmem:[%s1810] sm:$0xff]
    %1812 = vmatprep.subr.bf16.mxu0 0
    %1813 = vmatpush1.bf16.msra.mxu0 %v471
    %1814 = vmatprep.subr.bf16.mxu0 0
    %1815 = vmatpush1.bf16.msra.mxu0 %v470
    %1816 = vmatprep.subr.bf16.mxu0 0
    %1817 = vmatpush1.bf16.msra.mxu0 %v469
    %1818 = vmatprep.subr.bf16.mxu0 0
    %1819 = vmatpush1.bf16.msra.mxu0 %v468
    %1820 = vmatprep.subr.bf16.mxu0 0
    %1821 = vmatpush1.bf16.msra.mxu0 %v467
    %1822 = vmatprep.subr.bf16.mxu0 0
    %1823 = vmatpush1.bf16.msra.mxu0 %v466
    %1824 = vmatprep.subr.bf16.mxu0 0
    %1825 = vmatpush1.bf16.msra.mxu0 %v465
    %1826 = vmatprep.subr.bf16.mxu0 0
    %1827 = vmatpush1.bf16.msra.mxu0 %v464
    %1828 = vmatprep.subr.bf16.mxu0 0
    %1829 = vmatpush2.bf16.msra.mxu0 0
    %1830 = vmatprep.subr.bf16.mxu0 0
    %1831 = vmatpush2.bf16.msra.mxu0 0
    %1832 = vmatprep.subr.bf16.mxu0 0
    %1833 = vmatpush2.bf16.msra.mxu0 0
    %1834 = vmatprep.subr.bf16.mxu0 0
    %1835 = vmatpush2.bf16.msra.mxu0 0
    %1836 = vmatprep.subr.bf16.mxu0 0
    %1837 = vmatpush2.bf16.msra.mxu0 0
    %1838 = vmatprep.subr.bf16.mxu0 0
    %1839 = vmatpush2.bf16.msra.mxu0 0
    %1840 = vmatprep.subr.bf16.mxu0 0
    %1841 = vmatpush2.bf16.msra.mxu0 0
    %1842 = vmatprep.subr.bf16.mxu0 0
    %1843 = vmatpush2.bf16.msra.mxu0 0
    %1844 = vmatprep.mubr.bf16.mxu0 0
    %1845 = vmatmul.mubr.bf16.gmra.mxu0 %v1807
    %v1846 = vpop.f32.mrf.mxu0
    %v1847 = vadd.f32 0.0, %v1846
    %v1848 = vpop.f32.mrf.mxu0
    %v1849 = vpop.f32.mrf.mxu0
    %v1850 = vpop.f32.mrf.mxu0
    %1851 = vdwg.mxu0
    %v1852 = vadd.f32 %v1811, %v1847
    %v1853 = vmul.f32 %v1852, 0.5
    %v1854 = vtanh.pop %v1853
    %v1855 = vmul.f32 %v1854, 0.5
    %v1856 = vadd.f32 %v1855, 0.5
    %v1857 = vld [vmem:[%s1810 + $0x8] sm:$0xff]
    %1858 = vmatprep.subr.bf16.mxu0 0
    %1859 = vmatpush1.bf16.msra.mxu0 %v581
    %1860 = vmatprep.subr.bf16.mxu0 0
    %1861 = vmatpush1.bf16.msra.mxu0 %v580
    %1862 = vmatprep.subr.bf16.mxu0 0
    %1863 = vmatpush1.bf16.msra.mxu0 %v579
    %1864 = vmatprep.subr.bf16.mxu0 0
    %1865 = vmatpush1.bf16.msra.mxu0 %v578
    %1866 = vmatprep.subr.bf16.mxu0 0
    %1867 = vmatpush1.bf16.msra.mxu0 %v577
    %1868 = vmatprep.subr.bf16.mxu0 0
    %1869 = vmatpush1.bf16.msra.mxu0 %v576
    %1870 = vmatprep.subr.bf16.mxu0 0
    %1871 = vmatpush1.bf16.msra.mxu0 %v575
    %1872 = vmatprep.subr.bf16.mxu0 0
    %1873 = vmatpush1.bf16.msra.mxu0 %v574
    %1874 = vmatprep.subr.bf16.mxu0 0
    %1875 = vmatpush2.bf16.msra.mxu0 0
    %1876 = vmatprep.subr.bf16.mxu0 0
    %1877 = vmatpush2.bf16.msra.mxu0 0
    %1878 = vmatprep.subr.bf16.mxu0 0
    %1879 = vmatpush2.bf16.msra.mxu0 0
    %1880 = vmatprep.subr.bf16.mxu0 0
    %1881 = vmatpush2.bf16.msra.mxu0 0
    %1882 = vmatprep.subr.bf16.mxu0 0
    %1883 = vmatpush2.bf16.msra.mxu0 0
    %1884 = vmatprep.subr.bf16.mxu0 0
    %1885 = vmatpush2.bf16.msra.mxu0 0
    %1886 = vmatprep.subr.bf16.mxu0 0
    %1887 = vmatpush2.bf16.msra.mxu0 0
    %1888 = vmatprep.subr.bf16.mxu0 0
    %1889 = vmatpush2.bf16.msra.mxu0 0
    %1890 = vmatprep.mubr.bf16.mxu0 0
    %1891 = vmatmul.mubr.bf16.gmra.mxu0 %v1807
    %v1892 = vpop.f32.mrf.mxu0
    %v1893 = vadd.f32 0.0, %v1892
    %v1894 = vpop.f32.mrf.mxu0
    %v1895 = vpop.f32.mrf.mxu0
    %v1896 = vpop.f32.mrf.mxu0
    %1897 = vdwg.mxu0
    %v1898 = vadd.f32 %v1857, %v1893
    %v1899 = vmul.f32 %v1898, 0.5
    %v1900 = vtanh.pop %v1899
    %v1901 = vmul.f32 %v1900, 0.5
    %v1902 = vadd.f32 %v1901, 0.5
    %v1903 = vld [vmem:[%s1810 + $0x10] sm:$0xff]
    %1904 = vmatprep.subr.bf16.mxu0 0
    %1905 = vmatpush1.bf16.msra.mxu0 %v691
    %1906 = vmatprep.subr.bf16.mxu0 0
    %1907 = vmatpush1.bf16.msra.mxu0 %v690
    %1908 = vmatprep.subr.bf16.mxu0 0
    %1909 = vmatpush1.bf16.msra.mxu0 %v689
    %1910 = vmatprep.subr.bf16.mxu0 0
    %1911 = vmatpush1.bf16.msra.mxu0 %v688
    %1912 = vmatprep.subr.bf16.mxu0 0
    %1913 = vmatpush1.bf16.msra.mxu0 %v687
    %1914 = vmatprep.subr.bf16.mxu0 0
    %1915 = vmatpush1.bf16.msra.mxu0 %v686
    %1916 = vmatprep.subr.bf16.mxu0 0
    %1917 = vmatpush1.bf16.msra.mxu0 %v685
    %1918 = vmatprep.subr.bf16.mxu0 0
    %1919 = vmatpush1.bf16.msra.mxu0 %v684
    %1920 = vmatprep.subr.bf16.mxu0 0
    %1921 = vmatpush2.bf16.msra.mxu0 0
    %1922 = vmatprep.subr.bf16.mxu0 0
    %1923 = vmatpush2.bf16.msra.mxu0 0
    %1924 = vmatprep.subr.bf16.mxu0 0
    %1925 = vmatpush2.bf16.msra.mxu0 0
    %1926 = vmatprep.subr.bf16.mxu0 0
    %1927 = vmatpush2.bf16.msra.mxu0 0
    %1928 = vmatprep.subr.bf16.mxu0 0
    %1929 = vmatpush2.bf16.msra.mxu0 0
    %1930 = vmatprep.subr.bf16.mxu0 0
    %1931 = vmatpush2.bf16.msra.mxu0 0
    %1932 = vmatprep.subr.bf16.mxu0 0
    %1933 = vmatpush2.bf16.msra.mxu0 0
    %1934 = vmatprep.subr.bf16.mxu0 0
    %1935 = vmatpush2.bf16.msra.mxu0 0
    %1936 = vmatprep.mubr.bf16.mxu0 0
    %1937 = vmatmul.mubr.bf16.gmra.mxu0 %v1807
    %v1938 = vpop.f32.mrf.mxu0
    %v1939 = vadd.f32 0.0, %v1938
    %v1940 = vpop.f32.mrf.mxu0
    %v1941 = vpop.f32.mrf.mxu0
    %v1942 = vpop.f32.mrf.mxu0
    %1943 = vdwg.mxu0
    %v1944 = vadd.f32 %v1903, %v1939
    %v1945 = vtanh.pop %v1944
    %v1946 = vmul.f32 %v1902, %v1758
    %v1947 = vmul.f32 %v1856, %v1945
    %v1948 = vadd.f32 %v1946, %v1947
    %v1949 = vld [vmem:[%s1810 + $0x18] sm:$0xff]
    %1950 = vmatprep.subr.bf16.mxu0 0
    %1951 = vmatpush1.bf16.msra.mxu0 %v801
    %1952 = vmatprep.subr.bf16.mxu0 0
    %1953 = vmatpush1.bf16.msra.mxu0 %v800
    %1954 = vmatprep.subr.bf16.mxu0 0
    %1955 = vmatpush1.bf16.msra.mxu0 %v799
    %1956 = vmatprep.subr.bf16.mxu0 0
    %1957 = vmatpush1.bf16.msra.mxu0 %v798
    %1958 = vmatprep.subr.bf16.mxu0 0
    %1959 = vmatpush1.bf16.msra.mxu0 %v797
    %1960 = vmatprep.subr.bf16.mxu0 0
    %1961 = vmatpush1.bf16.msra.mxu0 %v796
    %1962 = vmatprep.subr.bf16.mxu0 0
    %1963 = vmatpush1.bf16.msra.mxu0 %v795
    %1964 = vmatprep.subr.bf16.mxu0 0
    %1965 = vmatpush1.bf16.msra.mxu0 %v794
    %1966 = vmatprep.subr.bf16.mxu0 0
    %1967 = vmatpush2.bf16.msra.mxu0 0
    %1968 = vmatprep.subr.bf16.mxu0 0
    %1969 = vmatpush2.bf16.msra.mxu0 0
    %1970 = vmatprep.subr.bf16.mxu0 0
    %1971 = vmatpush2.bf16.msra.mxu0 0
    %1972 = vmatprep.subr.bf16.mxu0 0
    %1973 = vmatpush2.bf16.msra.mxu0 0
    %1974 = vmatprep.subr.bf16.mxu0 0
    %1975 = vmatpush2.bf16.msra.mxu0 0
    %1976 = vmatprep.subr.bf16.mxu0 0
    %1977 = vmatpush2.bf16.msra.mxu0 0
    %1978 = vmatprep.subr.bf16.mxu0 0
    %1979 = vmatpush2.bf16.msra.mxu0 0
    %1980 = vmatprep.subr.bf16.mxu0 0
    %1981 = vmatpush2.bf16.msra.mxu0 0
    %1982 = vmatprep.mubr.bf16.mxu0 0
    %1983 = vmatmul.mubr.bf16.gmra.mxu0 %v1807
    %v1984 = vpop.f32.mrf.mxu0
    %v1985 = vadd.f32 0.0, %v1984
    %v1986 = vpop.f32.mrf.mxu0
    %v1987 = vpop.f32.mrf.mxu0
    %v1988 = vpop.f32.mrf.mxu0
    %1989 = vdwg.mxu0
    %v1990 = vadd.f32 %v1949, %v1985
    %v1991 = vmul.f32 %v1990, 0.5
    %v1992 = vtanh.pop %v1991
    %v1993 = vmul.f32 %v1992, 0.5
    %v1994 = vadd.f32 %v1993, 0.5
    %v1995 = vtanh.pop %v1948
    %v1996 = vmul.f32 %v1994, %v1995
    %v1997 = vpack.c.bf16 %v1996, %v1996
    %s1998 = smul.u32 7, 4
    %s1999 = smul.addr %s1998, 8
    %s2000 = scalar_lea.vmem [#allocation2], %s1999
    %v2001 = vld [vmem:[%s2000] sm:$0xff]
    %2002 = vmatprep.subr.bf16.mxu0 0
    %2003 = vmatpush1.bf16.msra.mxu0 %v471
    %2004 = vmatprep.subr.bf16.mxu0 0
    %2005 = vmatpush1.bf16.msra.mxu0 %v470
    %2006 = vmatprep.subr.bf16.mxu0 0
    %2007 = vmatpush1.bf16.msra.mxu0 %v469
    %2008 = vmatprep.subr.bf16.mxu0 0
    %2009 = vmatpush1.bf16.msra.mxu0 %v468
    %2010 = vmatprep.subr.bf16.mxu0 0
    %2011 = vmatpush1.bf16.msra.mxu0 %v467
    %2012 = vmatprep.subr.bf16.mxu0 0
    %2013 = vmatpush1.bf16.msra.mxu0 %v466
    %2014 = vmatprep.subr.bf16.mxu0 0
    %2015 = vmatpush1.bf16.msra.mxu0 %v465
    %2016 = vmatprep.subr.bf16.mxu0 0
    %2017 = vmatpush1.bf16.msra.mxu0 %v464
    %2018 = vmatprep.subr.bf16.mxu0 0
    %2019 = vmatpush2.bf16.msra.mxu0 0
    %2020 = vmatprep.subr.bf16.mxu0 0
    %2021 = vmatpush2.bf16.msra.mxu0 0
    %2022 = vmatprep.subr.bf16.mxu0 0
    %2023 = vmatpush2.bf16.msra.mxu0 0
    %2024 = vmatprep.subr.bf16.mxu0 0
    %2025 = vmatpush2.bf16.msra.mxu0 0
    %2026 = vmatprep.subr.bf16.mxu0 0
    %2027 = vmatpush2.bf16.msra.mxu0 0
    %2028 = vmatprep.subr.bf16.mxu0 0
    %2029 = vmatpush2.bf16.msra.mxu0 0
    %2030 = vmatprep.subr.bf16.mxu0 0
    %2031 = vmatpush2.bf16.msra.mxu0 0
    %2032 = vmatprep.subr.bf16.mxu0 0
    %2033 = vmatpush2.bf16.msra.mxu0 0
    %2034 = vmatprep.mubr.bf16.mxu0 0
    %2035 = vmatmul.mubr.bf16.gmra.mxu0 %v1997
    %v2036 = vpop.f32.mrf.mxu0
    %v2037 = vadd.f32 0.0, %v2036
    %v2038 = vpop.f32.mrf.mxu0
    %v2039 = vpop.f32.mrf.mxu0
    %v2040 = vpop.f32.mrf.mxu0
    %2041 = vdwg.mxu0
    %v2042 = vadd.f32 %v2001, %v2037
    %v2043 = vmul.f32 %v2042, 0.5
    %v2044 = vtanh.pop %v2043
    %v2045 = vmul.f32 %v2044, 0.5
    %v2046 = vadd.f32 %v2045, 0.5
    %v2047 = vld [vmem:[%s2000 + $0x8] sm:$0xff]
    %2048 = vmatprep.subr.bf16.mxu0 0
    %2049 = vmatpush1.bf16.msra.mxu0 %v581
    %2050 = vmatprep.subr.bf16.mxu0 0
    %2051 = vmatpush1.bf16.msra.mxu0 %v580
    %2052 = vmatprep.subr.bf16.mxu0 0
    %2053 = vmatpush1.bf16.msra.mxu0 %v579
    %2054 = vmatprep.subr.bf16.mxu0 0
    %2055 = vmatpush1.bf16.msra.mxu0 %v578
    %2056 = vmatprep.subr.bf16.mxu0 0
    %2057 = vmatpush1.bf16.msra.mxu0 %v577
    %2058 = vmatprep.subr.bf16.mxu0 0
    %2059 = vmatpush1.bf16.msra.mxu0 %v576
    %2060 = vmatprep.subr.bf16.mxu0 0
    %2061 = vmatpush1.bf16.msra.mxu0 %v575
    %2062 = vmatprep.subr.bf16.mxu0 0
    %2063 = vmatpush1.bf16.msra.mxu0 %v574
    %2064 = vmatprep.subr.bf16.mxu0 0
    %2065 = vmatpush2.bf16.msra.mxu0 0
    %2066 = vmatprep.subr.bf16.mxu0 0
    %2067 = vmatpush2.bf16.msra.mxu0 0
    %2068 = vmatprep.subr.bf16.mxu0 0
    %2069 = vmatpush2.bf16.msra.mxu0 0
    %2070 = vmatprep.subr.bf16.mxu0 0
    %2071 = vmatpush2.bf16.msra.mxu0 0
    %2072 = vmatprep.subr.bf16.mxu0 0
    %2073 = vmatpush2.bf16.msra.mxu0 0
    %2074 = vmatprep.subr.bf16.mxu0 0
    %2075 = vmatpush2.bf16.msra.mxu0 0
    %2076 = vmatprep.subr.bf16.mxu0 0
    %2077 = vmatpush2.bf16.msra.mxu0 0
    %2078 = vmatprep.subr.bf16.mxu0 0
    %2079 = vmatpush2.bf16.msra.mxu0 0
    %2080 = vmatprep.mubr.bf16.mxu0 0
    %2081 = vmatmul.mubr.bf16.gmra.mxu0 %v1997
    %v2082 = vpop.f32.mrf.mxu0
    %v2083 = vadd.f32 0.0, %v2082
    %v2084 = vpop.f32.mrf.mxu0
    %v2085 = vpop.f32.mrf.mxu0
    %v2086 = vpop.f32.mrf.mxu0
    %2087 = vdwg.mxu0
    %v2088 = vadd.f32 %v2047, %v2083
    %v2089 = vmul.f32 %v2088, 0.5
    %v2090 = vtanh.pop %v2089
    %v2091 = vmul.f32 %v2090, 0.5
    %v2092 = vadd.f32 %v2091, 0.5
    %v2093 = vld [vmem:[%s2000 + $0x10] sm:$0xff]
    %2094 = vmatprep.subr.bf16.mxu0 0
    %2095 = vmatpush1.bf16.msra.mxu0 %v691
    %2096 = vmatprep.subr.bf16.mxu0 0
    %2097 = vmatpush1.bf16.msra.mxu0 %v690
    %2098 = vmatprep.subr.bf16.mxu0 0
    %2099 = vmatpush1.bf16.msra.mxu0 %v689
    %2100 = vmatprep.subr.bf16.mxu0 0
    %2101 = vmatpush1.bf16.msra.mxu0 %v688
    %2102 = vmatprep.subr.bf16.mxu0 0
    %2103 = vmatpush1.bf16.msra.mxu0 %v687
    %2104 = vmatprep.subr.bf16.mxu0 0
    %2105 = vmatpush1.bf16.msra.mxu0 %v686
    %2106 = vmatprep.subr.bf16.mxu0 0
    %2107 = vmatpush1.bf16.msra.mxu0 %v685
    %2108 = vmatprep.subr.bf16.mxu0 0
    %2109 = vmatpush1.bf16.msra.mxu0 %v684
    %2110 = vmatprep.subr.bf16.mxu0 0
    %2111 = vmatpush2.bf16.msra.mxu0 0
    %2112 = vmatprep.subr.bf16.mxu0 0
    %2113 = vmatpush2.bf16.msra.mxu0 0
    %2114 = vmatprep.subr.bf16.mxu0 0
    %2115 = vmatpush2.bf16.msra.mxu0 0
    %2116 = vmatprep.subr.bf16.mxu0 0
    %2117 = vmatpush2.bf16.msra.mxu0 0
    %2118 = vmatprep.subr.bf16.mxu0 0
    %2119 = vmatpush2.bf16.msra.mxu0 0
    %2120 = vmatprep.subr.bf16.mxu0 0
    %2121 = vmatpush2.bf16.msra.mxu0 0
    %2122 = vmatprep.subr.bf16.mxu0 0
    %2123 = vmatpush2.bf16.msra.mxu0 0
    %2124 = vmatprep.subr.bf16.mxu0 0
    %2125 = vmatpush2.bf16.msra.mxu0 0
    %2126 = vmatprep.mubr.bf16.mxu0 0
    %2127 = vmatmul.mubr.bf16.gmra.mxu0 %v1997
    %v2128 = vpop.f32.mrf.mxu0
    %v2129 = vadd.f32 0.0, %v2128
    %v2130 = vpop.f32.mrf.mxu0
    %v2131 = vpop.f32.mrf.mxu0
    %v2132 = vpop.f32.mrf.mxu0
    %2133 = vdwg.mxu0
    %v2134 = vadd.f32 %v2093, %v2129
    %v2135 = vtanh.pop %v2134
    %v2136 = vmul.f32 %v2092, %v1948
    %v2137 = vmul.f32 %v2046, %v2135
    %v2138 = vadd.f32 %v2136, %v2137
    %v2139 = vld [vmem:[%s2000 + $0x18] sm:$0xff]
    %2140 = vmatprep.subr.bf16.mxu0 0
    %2141 = vmatpush1.bf16.msra.mxu0 %v801
    %2142 = vmatprep.subr.bf16.mxu0 0
    %2143 = vmatpush1.bf16.msra.mxu0 %v800
    %2144 = vmatprep.subr.bf16.mxu0 0
    %2145 = vmatpush1.bf16.msra.mxu0 %v799
    %2146 = vmatprep.subr.bf16.mxu0 0
    %2147 = vmatpush1.bf16.msra.mxu0 %v798
    %2148 = vmatprep.subr.bf16.mxu0 0
    %2149 = vmatpush1.bf16.msra.mxu0 %v797
    %2150 = vmatprep.subr.bf16.mxu0 0
    %2151 = vmatpush1.bf16.msra.mxu0 %v796
    %2152 = vmatprep.subr.bf16.mxu0 0
    %2153 = vmatpush1.bf16.msra.mxu0 %v795
    %2154 = vmatprep.subr.bf16.mxu0 0
    %2155 = vmatpush1.bf16.msra.mxu0 %v794
    %2156 = vmatprep.subr.bf16.mxu0 0
    %2157 = vmatpush2.bf16.msra.mxu0 0
    %2158 = vmatprep.subr.bf16.mxu0 0
    %2159 = vmatpush2.bf16.msra.mxu0 0
    %2160 = vmatprep.subr.bf16.mxu0 0
    %2161 = vmatpush2.bf16.msra.mxu0 0
    %2162 = vmatprep.subr.bf16.mxu0 0
    %2163 = vmatpush2.bf16.msra.mxu0 0
    %2164 = vmatprep.subr.bf16.mxu0 0
    %2165 = vmatpush2.bf16.msra.mxu0 0
    %2166 = vmatprep.subr.bf16.mxu0 0
    %2167 = vmatpush2.bf16.msra.mxu0 0
    %2168 = vmatprep.subr.bf16.mxu0 0
    %2169 = vmatpush2.bf16.msra.mxu0 0
    %2170 = vmatprep.subr.bf16.mxu0 0
    %2171 = vmatpush2.bf16.msra.mxu0 0
    %2172 = vmatprep.mubr.bf16.mxu0 0
    %2173 = vmatmul.mubr.bf16.gmra.mxu0 %v1997
    %v2174 = vpop.f32.mrf.mxu0
    %v2175 = vadd.f32 0.0, %v2174
    %v2176 = vpop.f32.mrf.mxu0
    %v2177 = vpop.f32.mrf.mxu0
    %v2178 = vpop.f32.mrf.mxu0
    %2179 = vdwg.mxu0
    %v2180 = vadd.f32 %v2139, %v2175
    %v2181 = vmul.f32 %v2180, 0.5
    %v2182 = vtanh.pop %v2181
    %v2183 = vmul.f32 %v2182, 0.5
    %v2184 = vadd.f32 %v2183, 0.5
    %v2185 = vtanh.pop %v2138
    %v2186 = vmul.f32 %v2184, %v2185
    %2187 = vst [vmem:[#allocation9] sm:$0xff] %v2186
    // Predicated region
    $region30: #{tpu_custom_call.1} parent=1 // pred_check
      _
    $region31: #{tpu_custom_call.1} parent=1 // pred_check_branch
      %2189 = sbr.rel (0) target = $region33
    $region32: #{tpu_custom_call.1} parent=1 // pred_region
      %s2191 = ssub.s32 128, 128
      %2192 = vsyncadd [#allocation5], %s2191
      %s2194 = sshll.u32 [#allocation9], 4
      %s2195 = int_to_ptr.vmem [resolvable:$true] %s2194
      %2197 = dma.vmem_to_hbm [thread:$0]  %s2195, 128, %s4, [#allocation5]
    $region33: #{tpu_custom_call.1} parent=1 // pred_fallthru
      _
    // Predicated region
    $region34: #{tpu_custom_call.1} parent=1 // pred_check
      _
    $region35: #{tpu_custom_call.1} parent=1 // pred_check_branch
      %2199 = sbr.rel (0) target = $region37
    $region36: #{tpu_custom_call.1} parent=1 // pred_region
      %2200 = dma.done [#allocation5], 128
    $region37: #{tpu_custom_call.1} parent=1 // pred_fallthru
      _
    %2201 = vsyncpa [#allocation4], 1
    %2202 = vsyncpa [#allocation7], 1
    %2203 = vsyncpa [#allocation5], 1

</llo_original>
